<compile_context>
chip_gen: v6e
topology: v6e:2x2x1
jax: 0.10.0
libtpu: 0.0.40
codegen_flags: <defaults>
</compile_context>

<pallas_src>
import functools

import jax
import jax.numpy as jnp
from jax.experimental import pallas as pl
from jax.experimental.pallas import tpu as pltpu

LANE = 128


# ------------------------------ small helpers -------------------------------
def _round_up(v, m):
    return (v + m - 1) // m * m


def _pad2(x, rows, cols, dtype):
    r, c = x.shape
    return jnp.pad(x.astype(dtype), ((0, rows - r), (0, cols - c)))


def _vmem_limit_bytes():
    """Explicit scoped-VMEM limit (default is only 16/32 MiB on v5e / v6e+)."""
    try:
        cap = int(pltpu.get_tpu_info().vmem_capacity_bytes)
    except Exception:
        cap = 64 * 1024 * 1024
    return min(int(cap * 0.85), 100 * 1024 * 1024)


def _pick_tm(n):
    """256-row blocks on >=v6e (256x256 MXU, fewer grid steps) when the graph
    is big enough to keep >=2 row blocks per core; 128 otherwise / on v5."""
    try:
        kind = jax.devices()[0].device_kind.lower()
    except Exception:
        kind = ""
    small_mxu = "v5" in kind
    if (not small_mxu) and n >= 2 * 256:
        return 256
    return 128


def _nbytes(a):
    return int(a.size) * a.dtype.itemsize


def _cost(flops, transcendentals, in_arrays, out_bytes):
    return pl.CostEstimate(
        flops=int(flops),
        transcendentals=int(transcendentals),
        bytes_accessed=int(sum(_nbytes(a) for a in in_arrays) + int(out_bytes)),
    )


def _log_softmax_masked(logits, out_dim):
    """Numerically stable log_softmax with lane-padded class columns masked."""
    col = jax.lax.broadcasted_iota(jnp.int32, logits.shape, 1)
    logits = jnp.where(col < out_dim, logits, jnp.float32(-1e30))
    m = jnp.max(logits, axis=1, keepdims=True)
    z = logits - m
    lse = jnp.log(jnp.sum(jnp.exp(z), axis=1, keepdims=True))
    return z - lse


# --------------------------- fused small-graph kernel -----------------------
def fused_kernel(x_ref, a_ref, uw_ref, ub_ref, f1w_ref, f1b_ref, f2w_ref,
                 f2b_ref, g1w_ref, g1b_ref, g2w_ref, g2b_ref, fcw_ref, fcb_ref,
                 logp_ref, w_ref, *, out_dim):
    x = x_ref[...]
    a = a_ref[...]
    xu = jnp.dot(x, uw_ref[...], preferred_element_type=jnp.float32) + ub_ref[...]
    h = jnp.maximum(
        jnp.dot(xu.astype(jnp.bfloat16), f1w_ref[...],
                preferred_element_type=jnp.float32) + f1b_ref[...], 0.0)
    wsig = jax.nn.sigmoid(
        jnp.dot(h.astype(jnp.bfloat16), f2w_ref[...],
                preferred_element_type=jnp.float32) + f2b_ref[...])
    xs = (xu * wsig).astype(jnp.bfloat16)
    z1 = jnp.dot(xs, g1w_ref[...],
                 preferred_element_type=jnp.float32).astype(jnp.bfloat16)
    h1 = jnp.maximum(
        jnp.dot(a, z1, preferred_element_type=jnp.float32) + g1b_ref[...], 0.0)
    # F.dropout(p=0.3, training=False) -> identity
    z2 = jnp.dot(h1.astype(jnp.bfloat16), g2w_ref[...],
                 preferred_element_type=jnp.float32).astype(jnp.bfloat16)
    h2 = jnp.maximum(
        jnp.dot(a, z2, preferred_element_type=jnp.float32) + g2b_ref[...], 0.0)
    logits = jnp.dot(h2.astype(jnp.bfloat16), fcw_ref[...],
                     preferred_element_type=jnp.float32) + fcb_ref[...]
    logp_ref[...] = _log_softmax_masked(logits, out_dim).astype(logp_ref.dtype)
    w_ref[...] = wsig.astype(w_ref.dtype)


# ---------------- Pass 1: SELayer + X @ W1 (row-local, tiled) ---------------
def se_proj_kernel(x_ref, uw_ref, ub_ref, f1w_ref, f1b_ref, f2w_ref, f2b_ref,
                   g1w_ref, z1_ref, w_ref):
    x = x_ref[...]
    xu = jnp.dot(x, uw_ref[...], preferred_element_type=jnp.float32) + ub_ref[...]
    h = jnp.maximum(
        jnp.dot(xu.astype(jnp.bfloat16), f1w_ref[...],
                preferred_element_type=jnp.float32) + f1b_ref[...], 0.0)
    wsig = jax.nn.sigmoid(
        jnp.dot(h.astype(jnp.bfloat16), f2w_ref[...],
                preferred_element_type=jnp.float32) + f2b_ref[...])
    xs = (xu * wsig).astype(jnp.bfloat16)
    z1_ref[...] = jnp.dot(xs, g1w_ref[...],
                          preferred_element_type=jnp.float32).astype(z1_ref.dtype)
    w_ref[...] = wsig.astype(w_ref.dtype)


# -------- Pass 2: h1 = relu(A @ Z1 + b1); Z2 = h1 @ W2 (K-split accum) ------
def gcn1_kernel(a_ref, z1_ref, g1b_ref, g2w_ref, z2_ref, acc_ref):
    k = pl.program_id(1)

    @pl.when(k == 0)
    def _():
        acc_ref[...] = jnp.zeros_like(acc_ref)

    acc_ref[...] += jnp.dot(a_ref[...], z1_ref[...],
                            preferred_element_type=jnp.float32)

    @pl.when(k == pl.num_programs(1) - 1)
    def _():
        h1 = jnp.maximum(acc_ref[...] + g1b_ref[...], 0.0)
        # F.dropout(p=0.3, training=False) -> identity
        z2_ref[...] = jnp.dot(h1.astype(jnp.bfloat16), g2w_ref[...],
                              preferred_element_type=jnp.float32).astype(z2_ref.dtype)


# -- Pass 3: h2 = relu(A @ Z2 + b2); fc; log_softmax (K-split accum + head) --
def gcn2_head_kernel(a_ref, z2_ref, g2b_ref, fcw_ref, fcb_ref, logp_ref,
                     acc_ref, *, out_dim):
    k = pl.program_id(1)

    @pl.when(k == 0)
    def _():
        acc_ref[...] = jnp.zeros_like(acc_ref)

    acc_ref[...] += jnp.dot(a_ref[...], z2_ref[...],
                            preferred_element_type=jnp.float32)

    @pl.when(k == pl.num_programs(1) - 1)
    def _():
        h2 = jnp.maximum(acc_ref[...] + g2b_ref[...], 0.0)
        # F.dropout(p=0.3, training=False) -> identity
        logits = jnp.dot(h2.astype(jnp.bfloat16), fcw_ref[...],
                         preferred_element_type=jnp.float32) + fcb_ref[...]
        logp_ref[...] = _log_softmax_masked(logits, out_dim).astype(logp_ref.dtype)


# ------------------------------- host wrappers -------------------------------
def _pad_params(params, fp, rp, h1p, h2p, op):
    bf, f32 = jnp.bfloat16, jnp.float32
    return dict(
        uw=_pad2(params["u_w"], fp, fp, bf), ub=_pad2(params["u_b"], 1, fp, f32),
        f1w=_pad2(params["f1_w"], fp, rp, bf), f1b=_pad2(params["f1_b"], 1, rp, f32),
        f2w=_pad2(params["f2_w"], rp, fp, bf), f2b=_pad2(params["f2_b"], 1, fp, f32),
        g1w=_pad2(params["g1_w"], fp, h1p, bf), g1b=_pad2(params["g1_b"], 1, h1p, f32),
        g2w=_pad2(params["g2_w"], h1p, h2p, bf), g2b=_pad2(params["g2_b"], 1, h2p, f32),
        fcw=_pad2(params["fc_w"], h2p, op, bf), fcb=_pad2(params["fc_b"], 1, op, f32),
    )


def _forward_fused(xp, ap, pp, npad, dims, out_dim):
    fp, rp, h1p, h2p, op = dims
    flops = 2 * npad * (fp * fp + fp * rp + rp * fp + fp * h1p
                        + npad * h1p + h1p * h2p + npad * h2p + h2p * op)
    trans = npad * (fp + op)
    out_bytes = npad * op * 4 + npad * fp * 2
    weight_keys = ("uw", "ub", "f1w", "f1b", "f2w", "f2b",
                   "g1w", "g1b", "g2w", "g2b", "fcw", "fcb")
    ce = _cost(flops, trans, [xp, ap] + [pp[k] for k in weight_keys], out_bytes)
    return pl.pallas_call(
        functools.partial(fused_kernel, out_dim=out_dim),
        out_shape=(jax.ShapeDtypeStruct((npad, op), jnp.float32),
                   jax.ShapeDtypeStruct((npad, fp), jnp.bfloat16)),
        compiler_params=pltpu.CompilerParams(vmem_limit_bytes=_vmem_limit_bytes()),
        cost_estimate=ce,
    )(xp, ap, *[pp[k] for k in weight_keys])


def _forward_tiled(xp, ap, pp, npad, dims, out_dim, tm, single_buffer):
    fp, rp, h1p, h2p, op = dims
    bf, f32 = jnp.bfloat16, jnp.float32
    vmem_limit = _vmem_limit_bytes()

    # Constant-index (resident) blocks: request single buffering when allowed.
    def const_spec(shape, grid_rank):
        idx = (lambda i: (0, 0)) if grid_rank == 1 else (lambda i, k: (0, 0))
        if single_buffer:
            return pl.BlockSpec(shape, idx, pipeline_mode=pl.Buffered(1))
        return pl.BlockSpec(shape, idx)

    # ---------------- Pass 1: SE + first projection ----------------
    grid1 = (npad // tm,)
    row1 = lambda cols: pl.BlockSpec((tm, cols), lambda i: (i, 0))
    ce1 = _cost(
        2 * npad * (fp * fp + fp * rp + rp * fp + fp * h1p),
        npad * fp,
        [xp] + [pp[k] for k in ("uw", "ub", "f1w", "f1b", "f2w", "f2b", "g1w")],
        npad * h1p * 2 + npad * fp * 2)
    z1, w_gate = pl.pallas_call(
        se_proj_kernel,
        grid=grid1,
        in_specs=[row1(fp),
                  const_spec((fp, fp), 1), const_spec((1, fp), 1),
                  const_spec((fp, rp), 1), const_spec((1, rp), 1),
                  const_spec((rp, fp), 1), const_spec((1, fp), 1),
                  const_spec((fp, h1p), 1)],
        out_specs=(row1(h1p), row1(fp)),
        out_shape=(jax.ShapeDtypeStruct((npad, h1p), bf),
                   jax.ShapeDtypeStruct((npad, fp), bf)),
        compiler_params=pltpu.CompilerParams(
            dimension_semantics=("parallel",), vmem_limit_bytes=vmem_limit),
        cost_estimate=ce1,
    )(xp, pp["uw"], pp["ub"], pp["f1w"], pp["f1b"], pp["f2w"], pp["f2b"], pp["g1w"])

    # K-split tile over node columns for the aggregation passes.
    tk = 128
    for cand in (512, 256, 128):
        if npad % cand == 0:
            tk = cand
            break
    grid2 = (npad // tm, npad // tk)
    agg_params = pltpu.CompilerParams(
        dimension_semantics=("parallel", "arbitrary"), vmem_limit_bytes=vmem_limit)

    # ---------------- Pass 2: first aggregation + second projection ----------
    ce2 = _cost(2 * npad * (npad * h1p + h1p * h2p), 0,
                [ap, z1, pp["g1b"], pp["g2w"]], npad * h2p * 2)
    z2 = pl.pallas_call(
        gcn1_kernel,
        grid=grid2,
        in_specs=[pl.BlockSpec((tm, tk), lambda i, k: (i, k)),
                  pl.BlockSpec((tk, h1p), lambda i, k: (k, 0)),
                  const_spec((1, h1p), 2),
                  const_spec((h1p, h2p), 2)],
        out_specs=pl.BlockSpec((tm, h2p), lambda i, k: (i, 0)),
        out_shape=jax.ShapeDtypeStruct((npad, h2p), bf),
        scratch_shapes=[pltpu.VMEM((tm, h1p), f32)],
        compiler_params=agg_params,
        cost_estimate=ce2,
    )(ap, z1, pp["g1b"], pp["g2w"])

    # ---------------- Pass 3: second aggregation + classifier head -----------
    ce3 = _cost(2 * npad * (npad * h2p + h2p * op), npad * op,
                [ap, z2, pp["g2b"], pp["fcw"], pp["fcb"]], npad * op * 4)
    logp = pl.pallas_call(
        functools.partial(gcn2_head_kernel, out_dim=out_dim),
        grid=grid2,
        in_specs=[pl.BlockSpec((tm, tk), lambda i, k: (i, k)),
                  pl.BlockSpec((tk, h2p), lambda i, k: (k, 0)),
                  const_spec((1, h2p), 2),
                  const_spec((h2p, op), 2),
                  const_spec((1, op), 2)],
        out_specs=pl.BlockSpec((tm, op), lambda i, k: (i, 0)),
        out_shape=jax.ShapeDtypeStruct((npad, op), f32),
        scratch_shapes=[pltpu.VMEM((tm, h2p), f32)],
        compiler_params=agg_params,
        cost_estimate=ce3,
    )(ap, z2, pp["g2b"], pp["fcw"], pp["fcb"])

    return logp, w_gate


def ssgcn_forward(x, a_hat, params, *, force_tiled=False):
    n, f_in = x.shape
    d_red = params["f1_w"].shape[1]
    h1_dim = params["g1_w"].shape[1]
    h2_dim = params["g2_w"].shape[1]
    out_dim = params["fc_w"].shape[1]

    fp = _round_up(f_in, LANE)
    rp = _round_up(d_red, LANE)
    h1p = _round_up(h1_dim, LANE)
    h2p = _round_up(h2_dim, LANE)
    op = _round_up(out_dim, LANE)
    dims = (fp, rp, h1p, h2p, op)

    # Small-graph fast path: everything comfortably VMEM-resident.
    fused = (not force_tiled) and (_round_up(n, LANE) <= 512) and (fp <= 1024)
    tm = LANE if fused else _pick_tm(n)
    npad = _round_up(n, tm)

    bf = jnp.bfloat16
    xp = _pad2(x, npad, fp, bf)
    ap = _pad2(a_hat, npad, npad, bf)
    # TODO(synk): quantize A_hat (int8 on v5e/v6e, fp8 on v7x) and stream only
    #             nonzero column blocks for real sparse graphs.
    pp = _pad_params(params, fp, rp, h1p, h2p, op)

    if fused:
        logp, w_gate = _forward_fused(xp, ap, pp, npad, dims, out_dim)
    else:
        try:
            logp, w_gate = _forward_tiled(xp, ap, pp, npad, dims, out_dim, tm,
                                          single_buffer=True)
        except Exception:
            # pipeline_mode=pl.Buffered(1) unsupported on this jax/libtpu:
            # retry with default double buffering.
            logp, w_gate = _forward_tiled(xp, ap, pp, npad, dims, out_dim, tm,
                                          single_buffer=False)

    return logp[:n, :out_dim], w_gate[:n, :f_in].astype(jnp.float32)


# ---------------------------- reference & setup ------------------------------
def ssgcn_reference(x, a_hat, params):
    xu = x @ params["u_w"] + params["u_b"]
    h = jnp.maximum(xu @ params["f1_w"] + params["f1_b"], 0.0)
    w = jax.nn.sigmoid(h @ params["f2_w"] + params["f2_b"])
    xs = xu * w
    h1 = jnp.maximum(a_hat @ (xs @ params["g1_w"]) + params["g1_b"], 0.0)
    h2 = jnp.maximum(a_hat @ (h1 @ params["g2_w"]) + params["g2_b"], 0.0)
    logits = h2 @ params["fc_w"] + params["fc_b"]
    return jax.nn.log_softmax(logits, axis=1), w


def build_norm_adj(edge_index, num_nodes):
    """Dense D^-1/2 (A + I) D^-1/2, mimicking torch_geometric GCNConv defaults."""
    src, dst = edge_index[0], edge_index[1]
    loop = jnp.arange(num_nodes, dtype=src.dtype)
    src = jnp.concatenate([src, loop])
    dst = jnp.concatenate([dst, loop])
    a = jnp.zeros((num_nodes, num_nodes), jnp.float32).at[dst, src].add(1.0)
    deg = jnp.sum(a, axis=1)
    dinv = jnp.where(deg > 0, 1.0 / jnp.sqrt(deg), 0.0)
    return dinv[:, None] * a * dinv[None, :]


def init_params(key, input_dim, hidden_dim1, hidden_dim2, output_dim, reduction=4):
    """Deterministic synthetic params. Linear weights stored pre-transposed [in, out]."""
    d_red = input_dim // reduction
    keys = jax.random.split(key, 7)

    def lin(k, d_in, d_out):
        s = 1.0 / jnp.sqrt(jnp.float32(d_in))
        w = jax.random.uniform(k, (d_in, d_out), jnp.float32, -s, s)
        b = jnp.zeros((1, d_out), jnp.float32)
        return w, b

    p = {}
    p["u_w"], p["u_b"] = lin(keys[0], input_dim, input_dim)
    p["f1_w"], p["f1_b"] = lin(keys[1], input_dim, d_red)
    p["f2_w"], p["f2_b"] = lin(keys[2], d_red, input_dim)
    p["g1_w"], p["g1_b"] = lin(keys[3], input_dim, hidden_dim1)
    p["g2_w"], p["g2_b"] = lin(keys[4], hidden_dim1, hidden_dim2)
    p["fc_w"], p["fc_b"] = lin(keys[5], hidden_dim2, output_dim)
    return p


if __name__ == "__main__":
    root_key = jax.random.PRNGKey(0)

    def run_case(n, f_in, h1, h2, out, force_tiled):
        kx, kp = jax.random.split(jax.random.fold_in(root_key, n))
        x = jax.random.normal(kx, (n, f_in), jnp.float32)

        # simple bidirectional ring graph
        src = jnp.arange(n, dtype=jnp.int32)
        dst = (src + 1) % n
        edge_index = jnp.stack(
            [jnp.concatenate([src, dst]), jnp.concatenate([dst, src])], axis=0)
        a_hat = build_norm_adj(edge_index, n)
        params = init_params(kp, f_in, h1, h2, out)

        logp, w = ssgcn_forward(x, a_hat, params, force_tiled=force_tiled)
        jax.block_until_ready((logp, w))

        assert logp.shape == (n, out)
        assert w.shape == (n, f_in)
        # log_softmax rows must sum to ~1 in prob space
        assert bool(jnp.allclose(jnp.sum(jnp.exp(logp), axis=1), 1.0, atol=1e-4))

        # loose check vs f32 reference (kernel matmuls run in bf16 with f32 accum)
        logp_ref, w_ref = ssgcn_reference(x, a_hat, params)
        assert bool(jnp.allclose(logp, logp_ref, atol=0.15, rtol=0.1)), "logp mismatch"
        assert bool(jnp.allclose(w, w_ref, atol=0.1, rtol=0.1)), "gate mismatch"

    # small graph -> fused single-call fast path
    run_case(16, 32, 32, 16, 8, force_tiled=False)
    # larger graph -> 3-pass tiled path with K-split aggregation accumulators
    run_case(300, 32, 32, 16, 8, force_tiled=True)

    print("KERNEL_OK")
</pallas_src>

<mosaic_0001>
module attributes {stable_mosaic.version = 11 : i64} {
  func.func @fused_kernel(%arg0: memref<128x128xbf16, #tpu.memory_space<vmem>>, %arg1: memref<128x128xbf16, #tpu.memory_space<vmem>>, %arg2: memref<128x128xbf16, #tpu.memory_space<vmem>>, %arg3: memref<1x128xf32, #tpu.memory_space<vmem>>, %arg4: memref<128x128xbf16, #tpu.memory_space<vmem>>, %arg5: memref<1x128xf32, #tpu.memory_space<vmem>>, %arg6: memref<128x128xbf16, #tpu.memory_space<vmem>>, %arg7: memref<1x128xf32, #tpu.memory_space<vmem>>, %arg8: memref<128x128xbf16, #tpu.memory_space<vmem>>, %arg9: memref<1x128xf32, #tpu.memory_space<vmem>>, %arg10: memref<128x128xbf16, #tpu.memory_space<vmem>>, %arg11: memref<1x128xf32, #tpu.memory_space<vmem>>, %arg12: memref<128x128xbf16, #tpu.memory_space<vmem>>, %arg13: memref<1x128xf32, #tpu.memory_space<vmem>>, %arg14: memref<128x128xf32, #tpu.memory_space<vmem>>, %arg15: memref<128x128xbf16, #tpu.memory_space<vmem>>) attributes {dimension_semantics = [], scalar_prefetch = 0 : i64, scratch_operands = 0 : i64, tpu.core_type = #tpu.core_type<tc>} {
    %c0 = arith.constant 0 : index
    %c0_0 = arith.constant 0 : index
    %0 = vector.load %arg0[%c0, %c0_0] : memref<128x128xbf16, #tpu.memory_space<vmem>>, vector<128x128xbf16>
    %c0_1 = arith.constant 0 : index
    %c0_2 = arith.constant 0 : index
    %1 = vector.load %arg1[%c0_1, %c0_2] : memref<128x128xbf16, #tpu.memory_space<vmem>>, vector<128x128xbf16>
    %c0_3 = arith.constant 0 : index
    %c0_4 = arith.constant 0 : index
    %2 = vector.load %arg2[%c0_3, %c0_4] : memref<128x128xbf16, #tpu.memory_space<vmem>>, vector<128x128xbf16>
    %cst = arith.constant dense<0.000000e+00> : vector<128x128xf32>
    %3 = tpu.matmul %0, %2, %cst {dimension_numbers = #tpu.dot_dimension_numbers<[1], [0], [0], [1], [0, 0, 1, 1], [], []>} : vector<128x128xbf16>, vector<128x128xbf16>, vector<128x128xf32> -> vector<128x128xf32>
    %c0_5 = arith.constant 0 : index
    %c0_6 = arith.constant 0 : index
    %4 = vector.load %arg3[%c0_5, %c0_6] : memref<1x128xf32, #tpu.memory_space<vmem>>, vector<1x128xf32>
    %5 = vector.broadcast %4 : vector<1x128xf32> to vector<128x128xf32>
    %6 = arith.addf %3, %5 : vector<128x128xf32>
    %7 = arith.truncf %6 : vector<128x128xf32> to vector<128x128xbf16>
    %c0_7 = arith.constant 0 : index
    %c0_8 = arith.constant 0 : index
    %8 = vector.load %arg4[%c0_7, %c0_8] : memref<128x128xbf16, #tpu.memory_space<vmem>>, vector<128x128xbf16>
    %cst_9 = arith.constant dense<0.000000e+00> : vector<128x128xf32>
    %9 = tpu.matmul %7, %8, %cst_9 {dimension_numbers = #tpu.dot_dimension_numbers<[1], [0], [0], [1], [0, 0, 1, 1], [], []>} : vector<128x128xbf16>, vector<128x128xbf16>, vector<128x128xf32> -> vector<128x128xf32>
    %c0_10 = arith.constant 0 : index
    %c0_11 = arith.constant 0 : index
    %10 = vector.load %arg5[%c0_10, %c0_11] : memref<1x128xf32, #tpu.memory_space<vmem>>, vector<1x128xf32>
    %11 = vector.broadcast %10 : vector<1x128xf32> to vector<128x128xf32>
    %12 = arith.addf %9, %11 : vector<128x128xf32>
    %cst_12 = arith.constant 0.000000e+00 : f32
    %13 = vector.broadcast %cst_12 : f32 to vector<128x128xf32>
    %14 = arith.maximumf %12, %13 : vector<128x128xf32>
    %15 = arith.truncf %14 : vector<128x128xf32> to vector<128x128xbf16>
    %c0_13 = arith.constant 0 : index
    %c0_14 = arith.constant 0 : index
    %16 = vector.load %arg6[%c0_13, %c0_14] : memref<128x128xbf16, #tpu.memory_space<vmem>>, vector<128x128xbf16>
    %cst_15 = arith.constant dense<0.000000e+00> : vector<128x128xf32>
    %17 = tpu.matmul %15, %16, %cst_15 {dimension_numbers = #tpu.dot_dimension_numbers<[1], [0], [0], [1], [0, 0, 1, 1], [], []>} : vector<128x128xbf16>, vector<128x128xbf16>, vector<128x128xf32> -> vector<128x128xf32>
    %c0_16 = arith.constant 0 : index
    %c0_17 = arith.constant 0 : index
    %18 = vector.load %arg7[%c0_16, %c0_17] : memref<1x128xf32, #tpu.memory_space<vmem>>, vector<1x128xf32>
    %19 = vector.broadcast %18 : vector<1x128xf32> to vector<128x128xf32>
    %20 = arith.addf %17, %19 : vector<128x128xf32>
    %21 = arith.negf %20 : vector<128x128xf32>
    %22 = math.exp %21 : vector<128x128xf32>
    %cst_18 = arith.constant 1.000000e+00 : f32
    %23 = vector.broadcast %cst_18 : f32 to vector<128x128xf32>
    %24 = arith.addf %23, %22 : vector<128x128xf32>
    %25 = arith.divf %23, %24 : vector<128x128xf32>
    %26 = arith.mulf %6, %25 : vector<128x128xf32>
    %27 = arith.truncf %26 : vector<128x128xf32> to vector<128x128xbf16>
    %c0_19 = arith.constant 0 : index
    %c0_20 = arith.constant 0 : index
    %28 = vector.load %arg8[%c0_19, %c0_20] : memref<128x128xbf16, #tpu.memory_space<vmem>>, vector<128x128xbf16>
    %cst_21 = arith.constant dense<0.000000e+00> : vector<128x128xf32>
    %29 = tpu.matmul %27, %28, %cst_21 {dimension_numbers = #tpu.dot_dimension_numbers<[1], [0], [0], [1], [0, 0, 1, 1], [], []>} : vector<128x128xbf16>, vector<128x128xbf16>, vector<128x128xf32> -> vector<128x128xf32>
    %30 = arith.truncf %29 : vector<128x128xf32> to vector<128x128xbf16>
    %cst_22 = arith.constant dense<0.000000e+00> : vector<128x128xf32>
    %31 = tpu.matmul %1, %30, %cst_22 {dimension_numbers = #tpu.dot_dimension_numbers<[1], [0], [0], [1], [0, 0, 1, 1], [], []>} : vector<128x128xbf16>, vector<128x128xbf16>, vector<128x128xf32> -> vector<128x128xf32>
    %c0_23 = arith.constant 0 : index
    %c0_24 = arith.constant 0 : index
    %32 = vector.load %arg9[%c0_23, %c0_24] : memref<1x128xf32, #tpu.memory_space<vmem>>, vector<1x128xf32>
    %33 = vector.broadcast %32 : vector<1x128xf32> to vector<128x128xf32>
    %34 = arith.addf %31, %33 : vector<128x128xf32>
    %cst_25 = arith.constant 0.000000e+00 : f32
    %35 = vector.broadcast %cst_25 : f32 to vector<128x128xf32>
    %36 = arith.maximumf %34, %35 : vector<128x128xf32>
    %37 = arith.truncf %36 : vector<128x128xf32> to vector<128x128xbf16>
    %c0_26 = arith.constant 0 : index
    %c0_27 = arith.constant 0 : index
    %38 = vector.load %arg10[%c0_26, %c0_27] : memref<128x128xbf16, #tpu.memory_space<vmem>>, vector<128x128xbf16>
    %cst_28 = arith.constant dense<0.000000e+00> : vector<128x128xf32>
    %39 = tpu.matmul %37, %38, %cst_28 {dimension_numbers = #tpu.dot_dimension_numbers<[1], [0], [0], [1], [0, 0, 1, 1], [], []>} : vector<128x128xbf16>, vector<128x128xbf16>, vector<128x128xf32> -> vector<128x128xf32>
    %40 = arith.truncf %39 : vector<128x128xf32> to vector<128x128xbf16>
    %cst_29 = arith.constant dense<0.000000e+00> : vector<128x128xf32>
    %41 = tpu.matmul %1, %40, %cst_29 {dimension_numbers = #tpu.dot_dimension_numbers<[1], [0], [0], [1], [0, 0, 1, 1], [], []>} : vector<128x128xbf16>, vector<128x128xbf16>, vector<128x128xf32> -> vector<128x128xf32>
    %c0_30 = arith.constant 0 : index
    %c0_31 = arith.constant 0 : index
    %42 = vector.load %arg11[%c0_30, %c0_31] : memref<1x128xf32, #tpu.memory_space<vmem>>, vector<1x128xf32>
    %43 = vector.broadcast %42 : vector<1x128xf32> to vector<128x128xf32>
    %44 = arith.addf %41, %43 : vector<128x128xf32>
    %cst_32 = arith.constant 0.000000e+00 : f32
    %45 = vector.broadcast %cst_32 : f32 to vector<128x128xf32>
    %46 = arith.maximumf %44, %45 : vector<128x128xf32>
    %47 = arith.truncf %46 : vector<128x128xf32> to vector<128x128xbf16>
    %c0_33 = arith.constant 0 : index
    %c0_34 = arith.constant 0 : index
    %48 = vector.load %arg12[%c0_33, %c0_34] : memref<128x128xbf16, #tpu.memory_space<vmem>>, vector<128x128xbf16>
    %cst_35 = arith.constant dense<0.000000e+00> : vector<128x128xf32>
    %49 = tpu.matmul %47, %48, %cst_35 {dimension_numbers = #tpu.dot_dimension_numbers<[1], [0], [0], [1], [0, 0, 1, 1], [], []>} : vector<128x128xbf16>, vector<128x128xbf16>, vector<128x128xf32> -> vector<128x128xf32>
    %c0_36 = arith.constant 0 : index
    %c0_37 = arith.constant 0 : index
    %50 = vector.load %arg13[%c0_36, %c0_37] : memref<1x128xf32, #tpu.memory_space<vmem>>, vector<1x128xf32>
    %51 = vector.broadcast %50 : vector<1x128xf32> to vector<128x128xf32>
    %52 = arith.addf %49, %51 : vector<128x128xf32>
    %53 = tpu.iota {dimensions = array<i32: 1>} : vector<128x128xi32>
    %c8_i32 = arith.constant 8 : i32
    %54 = vector.broadcast %c8_i32 : i32 to vector<128x128xi32>
    %55 = arith.cmpi slt, %53, %54 : vector<128x128xi32>
    %cst_38 = arith.constant -1.000000e+30 : f32
    %56 = vector.broadcast %cst_38 : f32 to vector<128x128xf32>
    %57 = arith.select %55, %52, %56 : vector<128x128xi1>, vector<128x128xf32>
    %cst_39 = arith.constant dense<0xFF800000> : vector<128xf32>
    %58 = vector.multi_reduction <maximumf>, %57, %cst_39 [1] : vector<128x128xf32> to vector<128xf32>
    %59 = vector.shape_cast %58 : vector<128xf32> to vector<128x1xf32>
    %60 = vector.broadcast %59 : vector<128x1xf32> to vector<128x128xf32>
    %61 = arith.subf %57, %60 : vector<128x128xf32>
    %62 = math.exp %61 : vector<128x128xf32>
    %cst_40 = arith.constant dense<0.000000e+00> : vector<128xf32>
    %63 = vector.multi_reduction <add>, %62, %cst_40 [1] : vector<128x128xf32> to vector<128xf32>
    %64 = vector.shape_cast %63 : vector<128xf32> to vector<128x1xf32>
    %65 = math.log %64 : vector<128x1xf32>
    %66 = vector.broadcast %65 : vector<128x1xf32> to vector<128x128xf32>
    %67 = arith.subf %61, %66 : vector<128x128xf32>
    %c0_41 = arith.constant 0 : index
    %c0_42 = arith.constant 0 : index
    %68 = vector.load %arg14[%c0_41, %c0_42] : memref<128x128xf32, #tpu.memory_space<vmem>>, vector<128x128xf32>
    tpu.vector_store %arg14[%c0_41, %c0_42], %67 {strides = array<i32>} : memref<128x128xf32, #tpu.memory_space<vmem>>, vector<128x128xf32>,
    %69 = arith.truncf %25 : vector<128x128xf32> to vector<128x128xbf16>
    %c0_43 = arith.constant 0 : index
    %c0_44 = arith.constant 0 : index
    %70 = vector.load %arg15[%c0_43, %c0_44] : memref<128x128xbf16, #tpu.memory_space<vmem>>, vector<128x128xbf16>
    tpu.vector_store %arg15[%c0_43, %c0_44], %69 {strides = array<i32>} : memref<128x128xbf16, #tpu.memory_space<vmem>>, vector<128x128xbf16>,
    return
  }
}

</mosaic_0001>

<llo_original>
// kernel: tpu_custom_call.1
$region0: #{tpu_custom_call.1}
  #allocation0 [shape = 'u32[]', space=smem, size = 0x4, offset = 0x4, fixed_abs, tag = 'smem constant byte address 0x4 - core index']
  #allocation1 [shape = 'u32[144,128]{1,0:T(1,128)}', space=vmem, size = 0x12000, scoped, tag = 'internal scratch']
  %s0 = inlined_call_operand.hbm [shape: bf16[128,128], index: 0, kind: input, shape index: {}]
  %s1 = inlined_call_operand.hbm [shape: bf16[128,128], index: 1, kind: input, shape index: {}]
  %s2 = inlined_call_operand.hbm [shape: bf16[128,128], index: 2, kind: input, shape index: {}]
  %s3 = inlined_call_operand.vmem [shape: f32[1,128], index: 3, kind: input, shape index: {}]
  %s4 = inlined_call_operand.hbm [shape: bf16[128,128], index: 4, kind: input, shape index: {}]
  %s5 = inlined_call_operand.vmem [shape: f32[1,128], index: 5, kind: input, shape index: {}]
  %s6 = inlined_call_operand.hbm [shape: bf16[128,128], index: 6, kind: input, shape index: {}]
  %s7 = inlined_call_operand.vmem [shape: f32[1,128], index: 7, kind: input, shape index: {}]
  %s8 = inlined_call_operand.hbm [shape: bf16[128,128], index: 8, kind: input, shape index: {}]
  %s9 = inlined_call_operand.vmem [shape: f32[1,128], index: 9, kind: input, shape index: {}]
  %s10 = inlined_call_operand.hbm [shape: bf16[128,128], index: 10, kind: input, shape index: {}]
  %s11 = inlined_call_operand.vmem [shape: f32[1,128], index: 11, kind: input, shape index: {}]
  %s12 = inlined_call_operand.hbm [shape: bf16[128,128], index: 12, kind: input, shape index: {}]
  %s13 = inlined_call_operand.vmem [shape: f32[1,128], index: 13, kind: input, shape index: {}]
  %s14 = inlined_call_operand.hbm [shape: f32[128,128], index: 14, kind: output, shape index: {0}]
  %s15 = inlined_call_operand.hbm [shape: bf16[128,128], index: 15, kind: output, shape index: {1}]
  %16 = xla_tuple %s14, %s15
  %s17 = sld [smem:[#allocation0]]
  $region106: #{tpu_custom_call.1} parent=0
    _
  %s19 = ssub.s32 1, %s17
  %s20 = scalar_select 0, %s19, %s17
  $region1: #{tpu_custom_call.1} parent=0
    #allocation2 [shape = 'u8[32768]{0}', space=vmem, size = 0x8000, scoped, tag = 'input window, operand 0, single buffered']
    #allocation3 [shape = 's32[1]{0}', space=sflag, size = 0x4, scoped, tag = 'scoped memory for tpu_custom_call.1']
    #allocation4 [shape = 's32[1]{0}', space=sflag, size = 0x4, scoped, tag = 'scoped memory for tpu_custom_call.1']
    #allocation5 [shape = 'u8[32768]{0}', space=vmem, size = 0x8000, scoped, tag = 'input window, operand 1, single buffered']
    #allocation6 [shape = 's32[1]{0}', space=sflag, size = 0x4, scoped, tag = 'scoped memory for tpu_custom_call.1']
    #allocation7 [shape = 'u8[32768]{0}', space=vmem, size = 0x8000, scoped, tag = 'input window, operand 2, single buffered']
    #allocation8 [shape = 'u8[32768]{0}', space=vmem, size = 0x8000, scoped, tag = 'input window, operand 4, single buffered']
    #allocation9 [shape = 's32[1]{0}', space=sflag, size = 0x4, scoped, tag = 'scoped memory for tpu_custom_call.1']
    #allocation10 [shape = 'u8[32768]{0}', space=vmem, size = 0x8000, scoped, tag = 'input window, operand 6, single buffered']
    #allocation11 [shape = 'u8[32768]{0}', space=vmem, size = 0x8000, scoped, tag = 'input window, operand 8, single buffered']
    #allocation12 [shape = 's32[1]{0}', space=sflag, size = 0x4, scoped, tag = 'scoped memory for tpu_custom_call.1']
    #allocation13 [shape = 'u8[32768]{0}', space=vmem, size = 0x8000, scoped, tag = 'input window, operand 10, single buffered']
    #allocation14 [shape = 'u8[32768]{0}', space=vmem, size = 0x8000, scoped, tag = 'input window, operand 12, single buffered']
    #allocation15 [shape = 's32[1]{0}', space=sflag, size = 0x4, scoped, tag = 'scoped memory for tpu_custom_call.1']
    #allocation16 [shape = 'u8[65536]{0}', space=vmem, size = 0x10000, scoped, tag = 'output window, operand 0, single buffered']
    #allocation17 [shape = 'u8[32768]{0}', space=vmem, size = 0x8000, scoped, tag = 'output window, operand 1, single buffered']
    #allocation18 [shape = 's32[1]{0}', space=sflag, size = 0x4, scoped, tag = 'scoped memory for tpu_custom_call.1']
    %21 = vsyncpa [#allocation3], 0
    %22 = vsyncpa [#allocation6], 0
    %23 = vsyncpa [#allocation9], 0
    %24 = vsyncpa [#allocation12], 0
    %25 = vsyncpa [#allocation15], 0
    %26 = vsyncpa [#allocation4], 0
    %27 = vsyncpa [#allocation18], 0
    // Predicated region
    $region2: #{tpu_custom_call.1} parent=1 // pred_check
      _
    $region3: #{tpu_custom_call.1} parent=1 // pred_check_branch
      %29 = sbr.rel (0) target = $region5
    $region4: #{tpu_custom_call.1} parent=1 // pred_region
      %s31 = ssub.s32 1024, 1024
      %32 = vsyncadd [#allocation3], %s31
      %s33 = sshll.u32 [#allocation2], 4
      %s34 = int_to_ptr.vmem [resolvable:$true] %s33
      %39 = dma.hbm_to_vmem [thread:$0]  %s0, 1024, %s34, [#allocation3], 64, 64, 4
    $region5: #{tpu_custom_call.1} parent=1 // pred_fallthru
      _
    // Predicated region
    $region6: #{tpu_custom_call.1} parent=1 // pred_check
      _
    $region7: #{tpu_custom_call.1} parent=1 // pred_check_branch
      %41 = sbr.rel (0) target = $region9
    $region8: #{tpu_custom_call.1} parent=1 // pred_region
      %s43 = ssub.s32 1024, 1024
      %44 = vsyncadd [#allocation6], %s43
      %s45 = sshll.u32 [#allocation5], 4
      %s46 = int_to_ptr.vmem [resolvable:$true] %s45
      %51 = dma.hbm_to_vmem [thread:$0]  %s1, 1024, %s46, [#allocation6], 64, 64, 4
    $region9: #{tpu_custom_call.1} parent=1 // pred_fallthru
      _
    // Predicated region
    $region10: #{tpu_custom_call.1} parent=1 // pred_check
      _
    $region11: #{tpu_custom_call.1} parent=1 // pred_check_branch
      %53 = sbr.rel (0) target = $region13
    $region12: #{tpu_custom_call.1} parent=1 // pred_region
      %s55 = ssub.s32 1024, 1024
      %56 = vsyncadd [#allocation6], %s55
      %s57 = sshll.u32 [#allocation7], 4
      %s58 = int_to_ptr.vmem [resolvable:$true] %s57
      %63 = dma.hbm_to_vmem [thread:$0]  %s2, 1024, %s58, [#allocation6], 64, 64, 4
    $region13: #{tpu_custom_call.1} parent=1 // pred_fallthru
      _
    // Predicated region
    $region14: #{tpu_custom_call.1} parent=1 // pred_check
      _
    $region15: #{tpu_custom_call.1} parent=1 // pred_check_branch
      %65 = sbr.rel (0) target = $region17
    $region16: #{tpu_custom_call.1} parent=1 // pred_region
      _
    $region17: #{tpu_custom_call.1} parent=1 // pred_fallthru
      _
    // Predicated region
    $region18: #{tpu_custom_call.1} parent=1 // pred_check
      _
    $region19: #{tpu_custom_call.1} parent=1 // pred_check_branch
      %67 = sbr.rel (0) target = $region21
    $region20: #{tpu_custom_call.1} parent=1 // pred_region
      %s69 = ssub.s32 1024, 1024
      %70 = vsyncadd [#allocation9], %s69
      %s71 = sshll.u32 [#allocation8], 4
      %s72 = int_to_ptr.vmem [resolvable:$true] %s71
      %77 = dma.hbm_to_vmem [thread:$0]  %s4, 1024, %s72, [#allocation9], 64, 64, 4
    $region21: #{tpu_custom_call.1} parent=1 // pred_fallthru
      _
    // Predicated region
    $region22: #{tpu_custom_call.1} parent=1 // pred_check
      _
    $region23: #{tpu_custom_call.1} parent=1 // pred_check_branch
      %79 = sbr.rel (0) target = $region25
    $region24: #{tpu_custom_call.1} parent=1 // pred_region
      _
    $region25: #{tpu_custom_call.1} parent=1 // pred_fallthru
      _
    // Predicated region
    $region26: #{tpu_custom_call.1} parent=1 // pred_check
      _
    $region27: #{tpu_custom_call.1} parent=1 // pred_check_branch
      %81 = sbr.rel (0) target = $region29
    $region28: #{tpu_custom_call.1} parent=1 // pred_region
      %s83 = ssub.s32 1024, 1024
      %84 = vsyncadd [#allocation9], %s83
      %s85 = sshll.u32 [#allocation10], 4
      %s86 = int_to_ptr.vmem [resolvable:$true] %s85
      %91 = dma.hbm_to_vmem [thread:$0]  %s6, 1024, %s86, [#allocation9], 64, 64, 4
    $region29: #{tpu_custom_call.1} parent=1 // pred_fallthru
      _
    // Predicated region
    $region30: #{tpu_custom_call.1} parent=1 // pred_check
      _
    $region31: #{tpu_custom_call.1} parent=1 // pred_check_branch
      %93 = sbr.rel (0) target = $region33
    $region32: #{tpu_custom_call.1} parent=1 // pred_region
      _
    $region33: #{tpu_custom_call.1} parent=1 // pred_fallthru
      _
    // Predicated region
    $region34: #{tpu_custom_call.1} parent=1 // pred_check
      _
    $region35: #{tpu_custom_call.1} parent=1 // pred_check_branch
      %95 = sbr.rel (0) target = $region37
    $region36: #{tpu_custom_call.1} parent=1 // pred_region
      %s97 = ssub.s32 1024, 1024
      %98 = vsyncadd [#allocation12], %s97
      %s99 = sshll.u32 [#allocation11], 4
      %s100 = int_to_ptr.vmem [resolvable:$true] %s99
      %105 = dma.hbm_to_vmem [thread:$0]  %s8, 1024, %s100, [#allocation12], 64, 64, 4
    $region37: #{tpu_custom_call.1} parent=1 // pred_fallthru
      _
    // Predicated region
    $region38: #{tpu_custom_call.1} parent=1 // pred_check
      _
    $region39: #{tpu_custom_call.1} parent=1 // pred_check_branch
      %107 = sbr.rel (0) target = $region41
    $region40: #{tpu_custom_call.1} parent=1 // pred_region
      _
    $region41: #{tpu_custom_call.1} parent=1 // pred_fallthru
      _
    // Predicated region
    $region42: #{tpu_custom_call.1} parent=1 // pred_check
      _
    $region43: #{tpu_custom_call.1} parent=1 // pred_check_branch
      %109 = sbr.rel (0) target = $region45
    $region44: #{tpu_custom_call.1} parent=1 // pred_region
      %s111 = ssub.s32 1024, 1024
      %112 = vsyncadd [#allocation12], %s111
      %s113 = sshll.u32 [#allocation13], 4
      %s114 = int_to_ptr.vmem [resolvable:$true] %s113
      %119 = dma.hbm_to_vmem [thread:$0]  %s10, 1024, %s114, [#allocation12], 64, 64, 4
    $region45: #{tpu_custom_call.1} parent=1 // pred_fallthru
      _
    // Predicated region
    $region46: #{tpu_custom_call.1} parent=1 // pred_check
      _
    $region47: #{tpu_custom_call.1} parent=1 // pred_check_branch
      %121 = sbr.rel (0) target = $region49
    $region48: #{tpu_custom_call.1} parent=1 // pred_region
      _
    $region49: #{tpu_custom_call.1} parent=1 // pred_fallthru
      _
    // Predicated region
    $region50: #{tpu_custom_call.1} parent=1 // pred_check
      _
    $region51: #{tpu_custom_call.1} parent=1 // pred_check_branch
      %123 = sbr.rel (0) target = $region53
    $region52: #{tpu_custom_call.1} parent=1 // pred_region
      %s125 = ssub.s32 1024, 1024
      %126 = vsyncadd [#allocation15], %s125
      %s127 = sshll.u32 [#allocation14], 4
      %s128 = int_to_ptr.vmem [resolvable:$true] %s127
      %133 = dma.hbm_to_vmem [thread:$0]  %s12, 1024, %s128, [#allocation15], 64, 64, 4
    $region53: #{tpu_custom_call.1} parent=1 // pred_fallthru
      _
    // Predicated region
    $region54: #{tpu_custom_call.1} parent=1 // pred_check
      _
    $region55: #{tpu_custom_call.1} parent=1 // pred_check_branch
      %135 = sbr.rel (0) target = $region57
    $region56: #{tpu_custom_call.1} parent=1 // pred_region
      _
    $region57: #{tpu_custom_call.1} parent=1 // pred_fallthru
      _
    // Predicated region
    $region58: #{tpu_custom_call.1} parent=1 // pred_check
      _
    $region59: #{tpu_custom_call.1} parent=1 // pred_check_branch
      %137 = sbr.rel (0) target = $region61
    $region60: #{tpu_custom_call.1} parent=1 // pred_region
      %138 = dma.done [#allocation3], 1024
    $region61: #{tpu_custom_call.1} parent=1 // pred_fallthru
      _
    // Predicated region
    $region62: #{tpu_custom_call.1} parent=1 // pred_check
      _
    $region63: #{tpu_custom_call.1} parent=1 // pred_check_branch
      %140 = sbr.rel (0) target = $region65
    $region64: #{tpu_custom_call.1} parent=1 // pred_region
      %141 = dma.done [#allocation6], 1024
    $region65: #{tpu_custom_call.1} parent=1 // pred_fallthru
      _
    // Predicated region
    $region66: #{tpu_custom_call.1} parent=1 // pred_check
      _
    $region67: #{tpu_custom_call.1} parent=1 // pred_check_branch
      %143 = sbr.rel (0) target = $region69
    $region68: #{tpu_custom_call.1} parent=1 // pred_region
      %144 = dma.done [#allocation6], 1024
    $region69: #{tpu_custom_call.1} parent=1 // pred_fallthru
      _
    // Predicated region
    $region70: #{tpu_custom_call.1} parent=1 // pred_check
      _
    $region71: #{tpu_custom_call.1} parent=1 // pred_check_branch
      %146 = sbr.rel (0) target = $region73
    $region72: #{tpu_custom_call.1} parent=1 // pred_region
      %147 = dma.done [#allocation9], 1024
    $region73: #{tpu_custom_call.1} parent=1 // pred_fallthru
      _
    // Predicated region
    $region74: #{tpu_custom_call.1} parent=1 // pred_check
      _
    $region75: #{tpu_custom_call.1} parent=1 // pred_check_branch
      %149 = sbr.rel (0) target = $region77
    $region76: #{tpu_custom_call.1} parent=1 // pred_region
      %150 = dma.done [#allocation9], 1024
    $region77: #{tpu_custom_call.1} parent=1 // pred_fallthru
      _
    // Predicated region
    $region78: #{tpu_custom_call.1} parent=1 // pred_check
      _
    $region79: #{tpu_custom_call.1} parent=1 // pred_check_branch
      %152 = sbr.rel (0) target = $region81
    $region80: #{tpu_custom_call.1} parent=1 // pred_region
      %153 = dma.done [#allocation12], 1024
    $region81: #{tpu_custom_call.1} parent=1 // pred_fallthru
      _
    // Predicated region
    $region82: #{tpu_custom_call.1} parent=1 // pred_check
      _
    $region83: #{tpu_custom_call.1} parent=1 // pred_check_branch
      %155 = sbr.rel (0) target = $region85
    $region84: #{tpu_custom_call.1} parent=1 // pred_region
      %156 = dma.done [#allocation12], 1024
    $region85: #{tpu_custom_call.1} parent=1 // pred_fallthru
      _
    // Predicated region
    $region86: #{tpu_custom_call.1} parent=1 // pred_check
      _
    $region87: #{tpu_custom_call.1} parent=1 // pred_check_branch
      %158 = sbr.rel (0) target = $region89
    $region88: #{tpu_custom_call.1} parent=1 // pred_region
      %159 = dma.done [#allocation15], 1024
    $region89: #{tpu_custom_call.1} parent=1 // pred_fallthru
      _
    %v161 = vld [vmem:[#allocation2] sm:$0xf]
    %v162 = vld [vmem:[#allocation2 + $0x4] sm:$0xf]
    %v163 = vld [vmem:[#allocation2 + $0x8] sm:$0xf]
    %v164 = vld [vmem:[#allocation2 + $0xc] sm:$0xf]
    %v165 = vld [vmem:[#allocation2 + $0x10] sm:$0xf]
    %v166 = vld [vmem:[#allocation2 + $0x14] sm:$0xf]
    %v167 = vld [vmem:[#allocation2 + $0x18] sm:$0xf]
    %v168 = vld [vmem:[#allocation2 + $0x1c] sm:$0xf]
    %v169 = vld [vmem:[#allocation2 + $0x20] sm:$0xf]
    %v170 = vld [vmem:[#allocation2 + $0x24] sm:$0xf]
    %v171 = vld [vmem:[#allocation2 + $0x28] sm:$0xf]
    %v172 = vld [vmem:[#allocation2 + $0x2c] sm:$0xf]
    %v173 = vld [vmem:[#allocation2 + $0x30] sm:$0xf]
    %v174 = vld [vmem:[#allocation2 + $0x34] sm:$0xf]
    %v175 = vld [vmem:[#allocation2 + $0x38] sm:$0xf]
    %v176 = vld [vmem:[#allocation2 + $0x3c] sm:$0xf]
    %v177 = vld [vmem:[#allocation5] sm:$0xf]
    %v178 = vld [vmem:[#allocation5 + $0x4] sm:$0xf]
    %v179 = vld [vmem:[#allocation5 + $0x8] sm:$0xf]
    %v180 = vld [vmem:[#allocation5 + $0xc] sm:$0xf]
    %v181 = vld [vmem:[#allocation5 + $0x10] sm:$0xf]
    %v182 = vld [vmem:[#allocation5 + $0x14] sm:$0xf]
    %v183 = vld [vmem:[#allocation5 + $0x18] sm:$0xf]
    %v184 = vld [vmem:[#allocation5 + $0x1c] sm:$0xf]
    %v185 = vld [vmem:[#allocation5 + $0x20] sm:$0xf]
    %v186 = vld [vmem:[#allocation5 + $0x24] sm:$0xf]
    %v187 = vld [vmem:[#allocation5 + $0x28] sm:$0xf]
    %v188 = vld [vmem:[#allocation5 + $0x2c] sm:$0xf]
    %v189 = vld [vmem:[#allocation5 + $0x30] sm:$0xf]
    %v190 = vld [vmem:[#allocation5 + $0x34] sm:$0xf]
    %v191 = vld [vmem:[#allocation5 + $0x38] sm:$0xf]
    %v192 = vld [vmem:[#allocation5 + $0x3c] sm:$0xf]
    %v193 = vld [vmem:[#allocation7] sm:$0xf]
    %v194 = vld [vmem:[#allocation7 + $0x4] sm:$0xf]
    %v195 = vld [vmem:[#allocation7 + $0x8] sm:$0xf]
    %v196 = vld [vmem:[#allocation7 + $0xc] sm:$0xf]
    %v197 = vld [vmem:[#allocation7 + $0x10] sm:$0xf]
    %v198 = vld [vmem:[#allocation7 + $0x14] sm:$0xf]
    %v199 = vld [vmem:[#allocation7 + $0x18] sm:$0xf]
    %v200 = vld [vmem:[#allocation7 + $0x1c] sm:$0xf]
    %v201 = vld [vmem:[#allocation7 + $0x20] sm:$0xf]
    %v202 = vld [vmem:[#allocation7 + $0x24] sm:$0xf]
    %v203 = vld [vmem:[#allocation7 + $0x28] sm:$0xf]
    %v204 = vld [vmem:[#allocation7 + $0x2c] sm:$0xf]
    %v205 = vld [vmem:[#allocation7 + $0x30] sm:$0xf]
    %v206 = vld [vmem:[#allocation7 + $0x34] sm:$0xf]
    %v207 = vld [vmem:[#allocation7 + $0x38] sm:$0xf]
    %v208 = vld [vmem:[#allocation7 + $0x3c] sm:$0xf]
    %v209 = vld [vmem:[%s3] sm:$0x1]
    %v211 = vlaneseq
    %v212 = vshrl.u32 %v211, 7
    %v213 = vsub.s32 0, %v212
    %v214 = vrot.slane %v209, %v213
    %v232 = vunpack.c.l.b16 %v161
    %v233 = vunpack.c.l.b16 %v162
    %v234 = vunpack.c.l.b16 %v163
    %v235 = vunpack.c.l.b16 %v164
    %v236 = vunpack.c.l.b16 %v165
    %v237 = vunpack.c.l.b16 %v166
    %v238 = vunpack.c.l.b16 %v167
    %v239 = vunpack.c.l.b16 %v168
    %v240 = vunpack.c.l.b16 %v169
    %v241 = vunpack.c.l.b16 %v170
    %v242 = vunpack.c.l.b16 %v171
    %v243 = vunpack.c.l.b16 %v172
    %v244 = vunpack.c.l.b16 %v173
    %v245 = vunpack.c.l.b16 %v174
    %v246 = vunpack.c.l.b16 %v175
    %v247 = vunpack.c.l.b16 %v176
    %v248 = vpack.c.b16 %v233, %v232
    %v249 = vpack.c.b16 %v235, %v234
    %v250 = vpack.c.b16 %v237, %v236
    %v251 = vpack.c.b16 %v239, %v238
    %v252 = vpack.c.b16 %v241, %v240
    %v253 = vpack.c.b16 %v243, %v242
    %v254 = vpack.c.b16 %v245, %v244
    %v255 = vpack.c.b16 %v247, %v246
    %v280 = vunpack.c.l.b16 %v193
    %v281 = vunpack.c.l.b16 %v194
    %v282 = vunpack.c.l.b16 %v195
    %v283 = vunpack.c.l.b16 %v196
    %v284 = vunpack.c.l.b16 %v197
    %v285 = vunpack.c.l.b16 %v198
    %v286 = vunpack.c.l.b16 %v199
    %v287 = vunpack.c.l.b16 %v200
    %v288 = vunpack.c.l.b16 %v201
    %v289 = vunpack.c.l.b16 %v202
    %v290 = vunpack.c.l.b16 %v203
    %v291 = vunpack.c.l.b16 %v204
    %v292 = vunpack.c.l.b16 %v205
    %v293 = vunpack.c.l.b16 %v206
    %v294 = vunpack.c.l.b16 %v207
    %v295 = vunpack.c.l.b16 %v208
    %v296 = vpack.c.b16 %v281, %v280
    %v297 = vpack.c.b16 %v283, %v282
    %v298 = vpack.c.b16 %v285, %v284
    %v299 = vpack.c.b16 %v287, %v286
    %v300 = vpack.c.b16 %v289, %v288
    %v301 = vpack.c.b16 %v291, %v290
    %v302 = vpack.c.b16 %v293, %v292
    %v303 = vpack.c.b16 %v295, %v294
    %312 = vmatprep.subr.bf16.mxu0 0
    %313 = vmatpush1.bf16.msra.mxu0 %v303
    %314 = vmatprep.subr.bf16.mxu0 0
    %315 = vmatpush1.bf16.msra.mxu0 %v302
    %316 = vmatprep.subr.bf16.mxu0 0
    %317 = vmatpush1.bf16.msra.mxu0 %v301
    %318 = vmatprep.subr.bf16.mxu0 0
    %319 = vmatpush1.bf16.msra.mxu0 %v300
    %320 = vmatprep.subr.bf16.mxu0 0
    %321 = vmatpush1.bf16.msra.mxu0 %v299
    %322 = vmatprep.subr.bf16.mxu0 0
    %323 = vmatpush1.bf16.msra.mxu0 %v298
    %324 = vmatprep.subr.bf16.mxu0 0
    %325 = vmatpush1.bf16.msra.mxu0 %v297
    %326 = vmatprep.subr.bf16.mxu0 0
    %327 = vmatpush1.bf16.msra.mxu0 %v296
    %328 = vmatprep.subr.bf16.mxu0 0
    %329 = vmatpush2.bf16.msra.mxu0 0
    %330 = vmatprep.subr.bf16.mxu0 0
    %331 = vmatpush2.bf16.msra.mxu0 0
    %332 = vmatprep.subr.bf16.mxu0 0
    %333 = vmatpush2.bf16.msra.mxu0 0
    %334 = vmatprep.subr.bf16.mxu0 0
    %335 = vmatpush2.bf16.msra.mxu0 0
    %336 = vmatprep.subr.bf16.mxu0 0
    %337 = vmatpush2.bf16.msra.mxu0 0
    %338 = vmatprep.subr.bf16.mxu0 0
    %339 = vmatpush2.bf16.msra.mxu0 0
    %340 = vmatprep.subr.bf16.mxu0 0
    %341 = vmatpush2.bf16.msra.mxu0 0
    %342 = vmatprep.subr.bf16.mxu0 0
    %343 = vmatpush2.bf16.msra.mxu0 0
    %344 = vmatprep.mubr.bf16.mxu0 0
    %345 = vmatmul.mubr.bf16.gmra.mxu0 %v248
    %v346 = vpop.f32.mrf.mxu0
    %v347 = vadd.f32 %v214, %v346
    %v348 = vpop.f32.mrf.mxu0
    %v349 = vpop.f32.mrf.mxu0
    %v350 = vadd.f32 %v214, %v349
    %v351 = vpop.f32.mrf.mxu0
    %352 = vmatprep.mubr.bf16.mxu0 0
    %353 = vmatmul.mubr.bf16.gmra.mxu0 %v249
    %v354 = vpop.f32.mrf.mxu0
    %v355 = vadd.f32 %v214, %v354
    %v356 = vpop.f32.mrf.mxu0
    %v357 = vpop.f32.mrf.mxu0
    %v358 = vadd.f32 %v214, %v357
    %v359 = vpop.f32.mrf.mxu0
    %360 = vmatprep.mubr.bf16.mxu0 0
    %361 = vmatmul.mubr.bf16.gmra.mxu0 %v250
    %v362 = vpop.f32.mrf.mxu0
    %v363 = vadd.f32 %v214, %v362
    %v364 = vpop.f32.mrf.mxu0
    %v365 = vpop.f32.mrf.mxu0
    %v366 = vadd.f32 %v214, %v365
    %v367 = vpop.f32.mrf.mxu0
    %368 = vmatprep.mubr.bf16.mxu0 0
    %369 = vmatmul.mubr.bf16.gmra.mxu0 %v251
    %v370 = vpop.f32.mrf.mxu0
    %v371 = vadd.f32 %v214, %v370
    %v372 = vpop.f32.mrf.mxu0
    %v373 = vpop.f32.mrf.mxu0
    %v374 = vadd.f32 %v214, %v373
    %v375 = vpop.f32.mrf.mxu0
    %376 = vmatprep.mubr.bf16.mxu0 0
    %377 = vmatmul.mubr.bf16.gmra.mxu0 %v252
    %v378 = vpop.f32.mrf.mxu0
    %v379 = vadd.f32 %v214, %v378
    %v380 = vpop.f32.mrf.mxu0
    %v381 = vpop.f32.mrf.mxu0
    %v382 = vadd.f32 %v214, %v381
    %v383 = vpop.f32.mrf.mxu0
    %384 = vmatprep.mubr.bf16.mxu0 0
    %385 = vmatmul.mubr.bf16.gmra.mxu0 %v253
    %v386 = vpop.f32.mrf.mxu0
    %v387 = vadd.f32 %v214, %v386
    %v388 = vpop.f32.mrf.mxu0
    %v389 = vpop.f32.mrf.mxu0
    %v390 = vadd.f32 %v214, %v389
    %v391 = vpop.f32.mrf.mxu0
    %392 = vmatprep.mubr.bf16.mxu0 0
    %393 = vmatmul.mubr.bf16.gmra.mxu0 %v254
    %v394 = vpop.f32.mrf.mxu0
    %v395 = vadd.f32 %v214, %v394
    %v396 = vpop.f32.mrf.mxu0
    %v397 = vpop.f32.mrf.mxu0
    %v398 = vadd.f32 %v214, %v397
    %v399 = vpop.f32.mrf.mxu0
    %400 = vmatprep.mubr.bf16.mxu0 0
    %401 = vmatmul.mubr.bf16.gmra.mxu0 %v255
    %v402 = vpop.f32.mrf.mxu0
    %v403 = vadd.f32 %v214, %v402
    %v404 = vpop.f32.mrf.mxu0
    %v405 = vpop.f32.mrf.mxu0
    %v406 = vadd.f32 %v214, %v405
    %v407 = vpop.f32.mrf.mxu0
    %408 = vdwg.mxu0
    %v409 = vpack.c.bf16 %v350, %v347
    %v410 = vpack.c.bf16 %v358, %v355
    %v411 = vpack.c.bf16 %v366, %v363
    %v412 = vpack.c.bf16 %v374, %v371
    %v413 = vpack.c.bf16 %v382, %v379
    %v414 = vpack.c.bf16 %v390, %v387
    %v415 = vpack.c.bf16 %v398, %v395
    %v416 = vpack.c.bf16 %v406, %v403
    %v417 = vld [vmem:[#allocation8] sm:$0xf]
    %v418 = vld [vmem:[#allocation8 + $0x4] sm:$0xf]
    %v419 = vld [vmem:[#allocation8 + $0x8] sm:$0xf]
    %v420 = vld [vmem:[#allocation8 + $0xc] sm:$0xf]
    %v421 = vld [vmem:[#allocation8 + $0x10] sm:$0xf]
    %v422 = vld [vmem:[#allocation8 + $0x14] sm:$0xf]
    %v423 = vld [vmem:[#allocation8 + $0x18] sm:$0xf]
    %v424 = vld [vmem:[#allocation8 + $0x1c] sm:$0xf]
    %v425 = vld [vmem:[#allocation8 + $0x20] sm:$0xf]
    %v426 = vld [vmem:[#allocation8 + $0x24] sm:$0xf]
    %v427 = vld [vmem:[#allocation8 + $0x28] sm:$0xf]
    %v428 = vld [vmem:[#allocation8 + $0x2c] sm:$0xf]
    %v429 = vld [vmem:[#allocation8 + $0x30] sm:$0xf]
    %v430 = vld [vmem:[#allocation8 + $0x34] sm:$0xf]
    %v431 = vld [vmem:[#allocation8 + $0x38] sm:$0xf]
    %v432 = vld [vmem:[#allocation8 + $0x3c] sm:$0xf]
    %v433 = vld [vmem:[%s5] sm:$0x1]
    %v435 = vlaneseq
    %v436 = vshrl.u32 %v435, 7
    %v437 = vsub.s32 0, %v436
    %v438 = vrot.slane %v433, %v437
    %v456 = vunpack.c.l.b16 %v417
    %v457 = vunpack.c.l.b16 %v418
    %v458 = vunpack.c.l.b16 %v419
    %v459 = vunpack.c.l.b16 %v420
    %v460 = vunpack.c.l.b16 %v421
    %v461 = vunpack.c.l.b16 %v422
    %v462 = vunpack.c.l.b16 %v423
    %v463 = vunpack.c.l.b16 %v424
    %v464 = vunpack.c.l.b16 %v425
    %v465 = vunpack.c.l.b16 %v426
    %v466 = vunpack.c.l.b16 %v427
    %v467 = vunpack.c.l.b16 %v428
    %v468 = vunpack.c.l.b16 %v429
    %v469 = vunpack.c.l.b16 %v430
    %v470 = vunpack.c.l.b16 %v431
    %v471 = vunpack.c.l.b16 %v432
    %v472 = vpack.c.b16 %v457, %v456
    %v473 = vpack.c.b16 %v459, %v458
    %v474 = vpack.c.b16 %v461, %v460
    %v475 = vpack.c.b16 %v463, %v462
    %v476 = vpack.c.b16 %v465, %v464
    %v477 = vpack.c.b16 %v467, %v466
    %v478 = vpack.c.b16 %v469, %v468
    %v479 = vpack.c.b16 %v471, %v470
    %488 = vmatprep.subr.bf16.mxu0 0
    %489 = vmatpush1.bf16.msra.mxu0 %v479
    %490 = vmatprep.subr.bf16.mxu0 0
    %491 = vmatpush1.bf16.msra.mxu0 %v478
    %492 = vmatprep.subr.bf16.mxu0 0
    %493 = vmatpush1.bf16.msra.mxu0 %v477
    %494 = vmatprep.subr.bf16.mxu0 0
    %495 = vmatpush1.bf16.msra.mxu0 %v476
    %496 = vmatprep.subr.bf16.mxu0 0
    %497 = vmatpush1.bf16.msra.mxu0 %v475
    %498 = vmatprep.subr.bf16.mxu0 0
    %499 = vmatpush1.bf16.msra.mxu0 %v474
    %500 = vmatprep.subr.bf16.mxu0 0
    %501 = vmatpush1.bf16.msra.mxu0 %v473
    %502 = vmatprep.subr.bf16.mxu0 0
    %503 = vmatpush1.bf16.msra.mxu0 %v472
    %504 = vmatprep.subr.bf16.mxu0 0
    %505 = vmatpush2.bf16.msra.mxu0 0
    %506 = vmatprep.subr.bf16.mxu0 0
    %507 = vmatpush2.bf16.msra.mxu0 0
    %508 = vmatprep.subr.bf16.mxu0 0
    %509 = vmatpush2.bf16.msra.mxu0 0
    %510 = vmatprep.subr.bf16.mxu0 0
    %511 = vmatpush2.bf16.msra.mxu0 0
    %512 = vmatprep.subr.bf16.mxu0 0
    %513 = vmatpush2.bf16.msra.mxu0 0
    %514 = vmatprep.subr.bf16.mxu0 0
    %515 = vmatpush2.bf16.msra.mxu0 0
    %516 = vmatprep.subr.bf16.mxu0 0
    %517 = vmatpush2.bf16.msra.mxu0 0
    %518 = vmatprep.subr.bf16.mxu0 0
    %519 = vmatpush2.bf16.msra.mxu0 0
    %520 = vmatprep.mubr.bf16.mxu0 0
    %521 = vmatmul.mubr.bf16.gmra.mxu0 %v409
    %v522 = vpop.f32.mrf.mxu0
    %v523 = vadd.f32 %v438, %v522
    %v524 = vpop.f32.mrf.mxu0
    %v525 = vpop.f32.mrf.mxu0
    %v526 = vadd.f32 %v438, %v525
    %v527 = vpop.f32.mrf.mxu0
    %528 = vmatprep.mubr.bf16.mxu0 0
    %529 = vmatmul.mubr.bf16.gmra.mxu0 %v410
    %v530 = vpop.f32.mrf.mxu0
    %v531 = vadd.f32 %v438, %v530
    %v532 = vpop.f32.mrf.mxu0
    %v533 = vpop.f32.mrf.mxu0
    %v534 = vadd.f32 %v438, %v533
    %v535 = vpop.f32.mrf.mxu0
    %536 = vmatprep.mubr.bf16.mxu0 0
    %537 = vmatmul.mubr.bf16.gmra.mxu0 %v411
    %v538 = vpop.f32.mrf.mxu0
    %v539 = vadd.f32 %v438, %v538
    %v540 = vpop.f32.mrf.mxu0
    %v541 = vpop.f32.mrf.mxu0
    %v542 = vadd.f32 %v438, %v541
    %v543 = vpop.f32.mrf.mxu0
    %544 = vmatprep.mubr.bf16.mxu0 0
    %545 = vmatmul.mubr.bf16.gmra.mxu0 %v412
    %v546 = vpop.f32.mrf.mxu0
    %v547 = vadd.f32 %v438, %v546
    %v548 = vpop.f32.mrf.mxu0
    %v549 = vpop.f32.mrf.mxu0
    %v550 = vadd.f32 %v438, %v549
    %v551 = vpop.f32.mrf.mxu0
    %552 = vmatprep.mubr.bf16.mxu0 0
    %553 = vmatmul.mubr.bf16.gmra.mxu0 %v413
    %v554 = vpop.f32.mrf.mxu0
    %v555 = vadd.f32 %v438, %v554
    %v556 = vpop.f32.mrf.mxu0
    %v557 = vpop.f32.mrf.mxu0
    %v558 = vadd.f32 %v438, %v557
    %v559 = vpop.f32.mrf.mxu0
    %560 = vmatprep.mubr.bf16.mxu0 0
    %561 = vmatmul.mubr.bf16.gmra.mxu0 %v414
    %v562 = vpop.f32.mrf.mxu0
    %v563 = vadd.f32 %v438, %v562
    %v564 = vpop.f32.mrf.mxu0
    %v565 = vpop.f32.mrf.mxu0
    %v566 = vadd.f32 %v438, %v565
    %v567 = vpop.f32.mrf.mxu0
    %568 = vmatprep.mubr.bf16.mxu0 0
    %569 = vmatmul.mubr.bf16.gmra.mxu0 %v415
    %v570 = vpop.f32.mrf.mxu0
    %v571 = vadd.f32 %v438, %v570
    %v572 = vpop.f32.mrf.mxu0
    %v573 = vpop.f32.mrf.mxu0
    %v574 = vadd.f32 %v438, %v573
    %v575 = vpop.f32.mrf.mxu0
    %576 = vmatprep.mubr.bf16.mxu0 0
    %577 = vmatmul.mubr.bf16.gmra.mxu0 %v416
    %v578 = vpop.f32.mrf.mxu0
    %v579 = vadd.f32 %v438, %v578
    %v580 = vpop.f32.mrf.mxu0
    %v581 = vpop.f32.mrf.mxu0
    %v582 = vadd.f32 %v438, %v581
    %v583 = vpop.f32.mrf.mxu0
    %584 = vdwg.mxu0
    %v585 = vmax.f32 %v523, 0.0
    %v586 = vmax.f32 %v526, 0.0
    %v587 = vmax.f32 %v531, 0.0
    %v588 = vmax.f32 %v534, 0.0
    %v589 = vmax.f32 %v539, 0.0
    %v590 = vmax.f32 %v542, 0.0
    %v591 = vmax.f32 %v547, 0.0
    %v592 = vmax.f32 %v550, 0.0
    %v593 = vmax.f32 %v555, 0.0
    %v594 = vmax.f32 %v558, 0.0
    %v595 = vmax.f32 %v563, 0.0
    %v596 = vmax.f32 %v566, 0.0
    %v597 = vmax.f32 %v571, 0.0
    %v598 = vmax.f32 %v574, 0.0
    %v599 = vmax.f32 %v579, 0.0
    %v600 = vmax.f32 %v582, 0.0
    %v601 = vpack.c.bf16 %v586, %v585
    %v602 = vpack.c.bf16 %v588, %v587
    %v603 = vpack.c.bf16 %v590, %v589
    %v604 = vpack.c.bf16 %v592, %v591
    %v605 = vpack.c.bf16 %v594, %v593
    %v606 = vpack.c.bf16 %v596, %v595
    %v607 = vpack.c.bf16 %v598, %v597
    %v608 = vpack.c.bf16 %v600, %v599
    %v609 = vld [vmem:[#allocation10] sm:$0xf]
    %v610 = vld [vmem:[#allocation10 + $0x4] sm:$0xf]
    %v611 = vld [vmem:[#allocation10 + $0x8] sm:$0xf]
    %v612 = vld [vmem:[#allocation10 + $0xc] sm:$0xf]
    %v613 = vld [vmem:[#allocation10 + $0x10] sm:$0xf]
    %v614 = vld [vmem:[#allocation10 + $0x14] sm:$0xf]
    %v615 = vld [vmem:[#allocation10 + $0x18] sm:$0xf]
    %v616 = vld [vmem:[#allocation10 + $0x1c] sm:$0xf]
    %v617 = vld [vmem:[#allocation10 + $0x20] sm:$0xf]
    %v618 = vld [vmem:[#allocation10 + $0x24] sm:$0xf]
    %v619 = vld [vmem:[#allocation10 + $0x28] sm:$0xf]
    %v620 = vld [vmem:[#allocation10 + $0x2c] sm:$0xf]
    %v621 = vld [vmem:[#allocation10 + $0x30] sm:$0xf]
    %v622 = vld [vmem:[#allocation10 + $0x34] sm:$0xf]
    %v623 = vld [vmem:[#allocation10 + $0x38] sm:$0xf]
    %v624 = vld [vmem:[#allocation10 + $0x3c] sm:$0xf]
    %v625 = vld [vmem:[%s7] sm:$0x1]
    %v627 = vlaneseq
    %v628 = vshrl.u32 %v627, 7
    %v629 = vsub.s32 0, %v628
    %v630 = vrot.slane %v625, %v629
    %v648 = vunpack.c.l.b16 %v609
    %v649 = vunpack.c.l.b16 %v610
    %v650 = vunpack.c.l.b16 %v611
    %v651 = vunpack.c.l.b16 %v612
    %v652 = vunpack.c.l.b16 %v613
    %v653 = vunpack.c.l.b16 %v614
    %v654 = vunpack.c.l.b16 %v615
    %v655 = vunpack.c.l.b16 %v616
    %v656 = vunpack.c.l.b16 %v617
    %v657 = vunpack.c.l.b16 %v618
    %v658 = vunpack.c.l.b16 %v619
    %v659 = vunpack.c.l.b16 %v620
    %v660 = vunpack.c.l.b16 %v621
    %v661 = vunpack.c.l.b16 %v622
    %v662 = vunpack.c.l.b16 %v623
    %v663 = vunpack.c.l.b16 %v624
    %v664 = vpack.c.b16 %v649, %v648
    %v665 = vpack.c.b16 %v651, %v650
    %v666 = vpack.c.b16 %v653, %v652
    %v667 = vpack.c.b16 %v655, %v654
    %v668 = vpack.c.b16 %v657, %v656
    %v669 = vpack.c.b16 %v659, %v658
    %v670 = vpack.c.b16 %v661, %v660
    %v671 = vpack.c.b16 %v663, %v662
    %680 = vmatprep.subr.bf16.mxu0 0
    %681 = vmatpush1.bf16.msra.mxu0 %v671
    %682 = vmatprep.subr.bf16.mxu0 0
    %683 = vmatpush1.bf16.msra.mxu0 %v670
    %684 = vmatprep.subr.bf16.mxu0 0
    %685 = vmatpush1.bf16.msra.mxu0 %v669
    %686 = vmatprep.subr.bf16.mxu0 0
    %687 = vmatpush1.bf16.msra.mxu0 %v668
    %688 = vmatprep.subr.bf16.mxu0 0
    %689 = vmatpush1.bf16.msra.mxu0 %v667
    %690 = vmatprep.subr.bf16.mxu0 0
    %691 = vmatpush1.bf16.msra.mxu0 %v666
    %692 = vmatprep.subr.bf16.mxu0 0
    %693 = vmatpush1.bf16.msra.mxu0 %v665
    %694 = vmatprep.subr.bf16.mxu0 0
    %695 = vmatpush1.bf16.msra.mxu0 %v664
    %696 = vmatprep.subr.bf16.mxu0 0
    %697 = vmatpush2.bf16.msra.mxu0 0
    %698 = vmatprep.subr.bf16.mxu0 0
    %699 = vmatpush2.bf16.msra.mxu0 0
    %700 = vmatprep.subr.bf16.mxu0 0
    %701 = vmatpush2.bf16.msra.mxu0 0
    %702 = vmatprep.subr.bf16.mxu0 0
    %703 = vmatpush2.bf16.msra.mxu0 0
    %704 = vmatprep.subr.bf16.mxu0 0
    %705 = vmatpush2.bf16.msra.mxu0 0
    %706 = vmatprep.subr.bf16.mxu0 0
    %707 = vmatpush2.bf16.msra.mxu0 0
    %708 = vmatprep.subr.bf16.mxu0 0
    %709 = vmatpush2.bf16.msra.mxu0 0
    %710 = vmatprep.subr.bf16.mxu0 0
    %711 = vmatpush2.bf16.msra.mxu0 0
    %712 = vmatprep.mubr.bf16.mxu0 0
    %713 = vmatmul.mubr.bf16.gmra.mxu0 %v601
    %v714 = vpop.f32.mrf.mxu0
    %v715 = vadd.f32 %v630, %v714
    %v716 = vpop.f32.mrf.mxu0
    %v717 = vpop.f32.mrf.mxu0
    %v718 = vadd.f32 %v630, %v717
    %v719 = vpop.f32.mrf.mxu0
    %720 = vmatprep.mubr.bf16.mxu0 0
    %721 = vmatmul.mubr.bf16.gmra.mxu0 %v602
    %v722 = vpop.f32.mrf.mxu0
    %v723 = vadd.f32 %v630, %v722
    %v724 = vpop.f32.mrf.mxu0
    %v725 = vpop.f32.mrf.mxu0
    %v726 = vadd.f32 %v630, %v725
    %v727 = vpop.f32.mrf.mxu0
    %728 = vmatprep.mubr.bf16.mxu0 0
    %729 = vmatmul.mubr.bf16.gmra.mxu0 %v603
    %v730 = vpop.f32.mrf.mxu0
    %v731 = vadd.f32 %v630, %v730
    %v732 = vpop.f32.mrf.mxu0
    %v733 = vpop.f32.mrf.mxu0
    %v734 = vadd.f32 %v630, %v733
    %v735 = vpop.f32.mrf.mxu0
    %736 = vmatprep.mubr.bf16.mxu0 0
    %737 = vmatmul.mubr.bf16.gmra.mxu0 %v604
    %v738 = vpop.f32.mrf.mxu0
    %v739 = vadd.f32 %v630, %v738
    %v740 = vpop.f32.mrf.mxu0
    %v741 = vpop.f32.mrf.mxu0
    %v742 = vadd.f32 %v630, %v741
    %v743 = vpop.f32.mrf.mxu0
    %744 = vmatprep.mubr.bf16.mxu0 0
    %745 = vmatmul.mubr.bf16.gmra.mxu0 %v605
    %v746 = vpop.f32.mrf.mxu0
    %v747 = vadd.f32 %v630, %v746
    %v748 = vpop.f32.mrf.mxu0
    %v749 = vpop.f32.mrf.mxu0
    %v750 = vadd.f32 %v630, %v749
    %v751 = vpop.f32.mrf.mxu0
    %752 = vmatprep.mubr.bf16.mxu0 0
    %753 = vmatmul.mubr.bf16.gmra.mxu0 %v606
    %v754 = vpop.f32.mrf.mxu0
    %v755 = vadd.f32 %v630, %v754
    %v756 = vpop.f32.mrf.mxu0
    %v757 = vpop.f32.mrf.mxu0
    %v758 = vadd.f32 %v630, %v757
    %v759 = vpop.f32.mrf.mxu0
    %760 = vmatprep.mubr.bf16.mxu0 0
    %761 = vmatmul.mubr.bf16.gmra.mxu0 %v607
    %v762 = vpop.f32.mrf.mxu0
    %v763 = vadd.f32 %v630, %v762
    %v764 = vpop.f32.mrf.mxu0
    %v765 = vpop.f32.mrf.mxu0
    %v766 = vadd.f32 %v630, %v765
    %v767 = vpop.f32.mrf.mxu0
    %768 = vmatprep.mubr.bf16.mxu0 0
    %769 = vmatmul.mubr.bf16.gmra.mxu0 %v608
    %v770 = vpop.f32.mrf.mxu0
    %v771 = vadd.f32 %v630, %v770
    %v772 = vpop.f32.mrf.mxu0
    %v773 = vpop.f32.mrf.mxu0
    %v774 = vadd.f32 %v630, %v773
    %v775 = vpop.f32.mrf.mxu0
    %776 = vdwg.mxu0
    %v777 = vxor.u32 %v715, 2147483648
    %v778 = vxor.u32 %v718, 2147483648
    %v779 = vxor.u32 %v723, 2147483648
    %v780 = vxor.u32 %v726, 2147483648
    %v781 = vxor.u32 %v731, 2147483648
    %v782 = vxor.u32 %v734, 2147483648
    %v783 = vxor.u32 %v739, 2147483648
    %v784 = vxor.u32 %v742, 2147483648
    %v785 = vxor.u32 %v747, 2147483648
    %v786 = vxor.u32 %v750, 2147483648
    %v787 = vxor.u32 %v755, 2147483648
    %v788 = vxor.u32 %v758, 2147483648
    %v789 = vxor.u32 %v763, 2147483648
    %v790 = vxor.u32 %v766, 2147483648
    %v791 = vxor.u32 %v771, 2147483648
    %v792 = vxor.u32 %v774, 2147483648
    %v793 = vmul.f32 %v777, 1.442695
    %v794 = vpow.pop %v793
    %v795 = vmul.f32 %v778, 1.442695
    %v796 = vpow.pop %v795
    %v797 = vmul.f32 %v779, 1.442695
    %v798 = vpow.pop %v797
    %v799 = vmul.f32 %v780, 1.442695
    %v800 = vpow.pop %v799
    %v801 = vmul.f32 %v781, 1.442695
    %v802 = vpow.pop %v801
    %v803 = vmul.f32 %v782, 1.442695
    %v804 = vpow.pop %v803
    %v805 = vmul.f32 %v783, 1.442695
    %v806 = vpow.pop %v805
    %v807 = vmul.f32 %v784, 1.442695
    %v808 = vpow.pop %v807
    %v809 = vmul.f32 %v785, 1.442695
    %v810 = vpow.pop %v809
    %v811 = vmul.f32 %v786, 1.442695
    %v812 = vpow.pop %v811
    %v813 = vmul.f32 %v787, 1.442695
    %v814 = vpow.pop %v813
    %v815 = vmul.f32 %v788, 1.442695
    %v816 = vpow.pop %v815
    %v817 = vmul.f32 %v789, 1.442695
    %v818 = vpow.pop %v817
    %v819 = vmul.f32 %v790, 1.442695
    %v820 = vpow.pop %v819
    %v821 = vmul.f32 %v791, 1.442695
    %v822 = vpow.pop %v821
    %v823 = vmul.f32 %v792, 1.442695
    %v824 = vpow.pop %v823
    %v825 = vadd.f32 %v794, 1.0
    %v826 = vadd.f32 %v796, 1.0
    %v827 = vadd.f32 %v798, 1.0
    %v828 = vadd.f32 %v800, 1.0
    %v829 = vadd.f32 %v802, 1.0
    %v830 = vadd.f32 %v804, 1.0
    %v831 = vadd.f32 %v806, 1.0
    %v832 = vadd.f32 %v808, 1.0
    %v833 = vadd.f32 %v810, 1.0
    %v834 = vadd.f32 %v812, 1.0
    %v835 = vadd.f32 %v814, 1.0
    %v836 = vadd.f32 %v816, 1.0
    %v837 = vadd.f32 %v818, 1.0
    %v838 = vadd.f32 %v820, 1.0
    %v839 = vadd.f32 %v822, 1.0
    %v840 = vadd.f32 %v824, 1.0
    %v841 = vrcp.pop %v825
    %v842 = vmul.f32 1.0, %v841
    %v843 = vrcp.pop %v826
    %v844 = vmul.f32 1.0, %v843
    %v845 = vrcp.pop %v827
    %v846 = vmul.f32 1.0, %v845
    %v847 = vrcp.pop %v828
    %v848 = vmul.f32 1.0, %v847
    %v849 = vrcp.pop %v829
    %v850 = vmul.f32 1.0, %v849
    %v851 = vrcp.pop %v830
    %v852 = vmul.f32 1.0, %v851
    %v853 = vrcp.pop %v831
    %v854 = vmul.f32 1.0, %v853
    %v855 = vrcp.pop %v832
    %v856 = vmul.f32 1.0, %v855
    %v857 = vrcp.pop %v833
    %v858 = vmul.f32 1.0, %v857
    %v859 = vrcp.pop %v834
    %v860 = vmul.f32 1.0, %v859
    %v861 = vrcp.pop %v835
    %v862 = vmul.f32 1.0, %v861
    %v863 = vrcp.pop %v836
    %v864 = vmul.f32 1.0, %v863
    %v865 = vrcp.pop %v837
    %v866 = vmul.f32 1.0, %v865
    %v867 = vrcp.pop %v838
    %v868 = vmul.f32 1.0, %v867
    %v869 = vrcp.pop %v839
    %v870 = vmul.f32 1.0, %v869
    %v871 = vrcp.pop %v840
    %v872 = vmul.f32 1.0, %v871
    %v873 = vmul.f32 %v347, %v842
    %v874 = vmul.f32 %v350, %v844
    %v875 = vmul.f32 %v355, %v846
    %v876 = vmul.f32 %v358, %v848
    %v877 = vmul.f32 %v363, %v850
    %v878 = vmul.f32 %v366, %v852
    %v879 = vmul.f32 %v371, %v854
    %v880 = vmul.f32 %v374, %v856
    %v881 = vmul.f32 %v379, %v858
    %v882 = vmul.f32 %v382, %v860
    %v883 = vmul.f32 %v387, %v862
    %v884 = vmul.f32 %v390, %v864
    %v885 = vmul.f32 %v395, %v866
    %v886 = vmul.f32 %v398, %v868
    %v887 = vmul.f32 %v403, %v870
    %v888 = vmul.f32 %v406, %v872
    %v889 = vpack.c.bf16 %v874, %v873
    %v890 = vpack.c.bf16 %v876, %v875
    %v891 = vpack.c.bf16 %v878, %v877
    %v892 = vpack.c.bf16 %v880, %v879
    %v893 = vpack.c.bf16 %v882, %v881
    %v894 = vpack.c.bf16 %v884, %v883
    %v895 = vpack.c.bf16 %v886, %v885
    %v896 = vpack.c.bf16 %v888, %v887
    %v897 = vld [vmem:[#allocation11] sm:$0xf]
    %v898 = vld [vmem:[#allocation11 + $0x4] sm:$0xf]
    %v899 = vld [vmem:[#allocation11 + $0x8] sm:$0xf]
    %v900 = vld [vmem:[#allocation11 + $0xc] sm:$0xf]
    %v901 = vld [vmem:[#allocation11 + $0x10] sm:$0xf]
    %v902 = vld [vmem:[#allocation11 + $0x14] sm:$0xf]
    %v903 = vld [vmem:[#allocation11 + $0x18] sm:$0xf]
    %v904 = vld [vmem:[#allocation11 + $0x1c] sm:$0xf]
    %v905 = vld [vmem:[#allocation11 + $0x20] sm:$0xf]
    %v906 = vld [vmem:[#allocation11 + $0x24] sm:$0xf]
    %v907 = vld [vmem:[#allocation11 + $0x28] sm:$0xf]
    %v908 = vld [vmem:[#allocation11 + $0x2c] sm:$0xf]
    %v909 = vld [vmem:[#allocation11 + $0x30] sm:$0xf]
    %v910 = vld [vmem:[#allocation11 + $0x34] sm:$0xf]
    %v911 = vld [vmem:[#allocation11 + $0x38] sm:$0xf]
    %v912 = vld [vmem:[#allocation11 + $0x3c] sm:$0xf]
    %v929 = vunpack.c.l.b16 %v897
    %v930 = vunpack.c.l.b16 %v898
    %v931 = vunpack.c.l.b16 %v899
    %v932 = vunpack.c.l.b16 %v900
    %v933 = vunpack.c.l.b16 %v901
    %v934 = vunpack.c.l.b16 %v902
    %v935 = vunpack.c.l.b16 %v903
    %v936 = vunpack.c.l.b16 %v904
    %v937 = vunpack.c.l.b16 %v905
    %v938 = vunpack.c.l.b16 %v906
    %v939 = vunpack.c.l.b16 %v907
    %v940 = vunpack.c.l.b16 %v908
    %v941 = vunpack.c.l.b16 %v909
    %v942 = vunpack.c.l.b16 %v910
    %v943 = vunpack.c.l.b16 %v911
    %v944 = vunpack.c.l.b16 %v912
    %v945 = vpack.c.b16 %v930, %v929
    %v946 = vpack.c.b16 %v932, %v931
    %v947 = vpack.c.b16 %v934, %v933
    %v948 = vpack.c.b16 %v936, %v935
    %v949 = vpack.c.b16 %v938, %v937
    %v950 = vpack.c.b16 %v940, %v939
    %v951 = vpack.c.b16 %v942, %v941
    %v952 = vpack.c.b16 %v944, %v943
    %961 = vmatprep.subr.bf16.mxu0 0
    %962 = vmatpush1.bf16.msra.mxu0 %v952
    %963 = vmatprep.subr.bf16.mxu0 0
    %964 = vmatpush1.bf16.msra.mxu0 %v951
    %965 = vmatprep.subr.bf16.mxu0 0
    %966 = vmatpush1.bf16.msra.mxu0 %v950
    %967 = vmatprep.subr.bf16.mxu0 0
    %968 = vmatpush1.bf16.msra.mxu0 %v949
    %969 = vmatprep.subr.bf16.mxu0 0
    %970 = vmatpush1.bf16.msra.mxu0 %v948
    %971 = vmatprep.subr.bf16.mxu0 0
    %972 = vmatpush1.bf16.msra.mxu0 %v947
    %973 = vmatprep.subr.bf16.mxu0 0
    %974 = vmatpush1.bf16.msra.mxu0 %v946
    %975 = vmatprep.subr.bf16.mxu0 0
    %976 = vmatpush1.bf16.msra.mxu0 %v945
    %977 = vmatprep.subr.bf16.mxu0 0
    %978 = vmatpush2.bf16.msra.mxu0 0
    %979 = vmatprep.subr.bf16.mxu0 0
    %980 = vmatpush2.bf16.msra.mxu0 0
    %981 = vmatprep.subr.bf16.mxu0 0
    %982 = vmatpush2.bf16.msra.mxu0 0
    %983 = vmatprep.subr.bf16.mxu0 0
    %984 = vmatpush2.bf16.msra.mxu0 0
    %985 = vmatprep.subr.bf16.mxu0 0
    %986 = vmatpush2.bf16.msra.mxu0 0
    %987 = vmatprep.subr.bf16.mxu0 0
    %988 = vmatpush2.bf16.msra.mxu0 0
    %989 = vmatprep.subr.bf16.mxu0 0
    %990 = vmatpush2.bf16.msra.mxu0 0
    %991 = vmatprep.subr.bf16.mxu0 0
    %992 = vmatpush2.bf16.msra.mxu0 0
    %993 = vmatprep.mubr.bf16.mxu0 0
    %994 = vmatmul.mubr.bf16.gmra.mxu0 %v889
    %v995 = vpop.f32.mrf.mxu0
    %v996 = vadd.f32 0.0, %v995
    %v997 = vpop.f32.mrf.mxu0
    %v998 = vpop.f32.mrf.mxu0
    %v999 = vadd.f32 0.0, %v998
    %v1000 = vpop.f32.mrf.mxu0
    %1001 = vmatprep.mubr.bf16.mxu0 0
    %1002 = vmatmul.mubr.bf16.gmra.mxu0 %v890
    %v1003 = vpop.f32.mrf.mxu0
    %v1004 = vadd.f32 0.0, %v1003
    %v1005 = vpop.f32.mrf.mxu0
    %v1006 = vpop.f32.mrf.mxu0
    %v1007 = vadd.f32 0.0, %v1006
    %v1008 = vpop.f32.mrf.mxu0
    %1009 = vmatprep.mubr.bf16.mxu0 0
    %1010 = vmatmul.mubr.bf16.gmra.mxu0 %v891
    %v1011 = vpop.f32.mrf.mxu0
    %v1012 = vadd.f32 0.0, %v1011
    %v1013 = vpop.f32.mrf.mxu0
    %v1014 = vpop.f32.mrf.mxu0
    %v1015 = vadd.f32 0.0, %v1014
    %v1016 = vpop.f32.mrf.mxu0
    %1017 = vmatprep.mubr.bf16.mxu0 0
    %1018 = vmatmul.mubr.bf16.gmra.mxu0 %v892
    %v1019 = vpop.f32.mrf.mxu0
    %v1020 = vadd.f32 0.0, %v1019
    %v1021 = vpop.f32.mrf.mxu0
    %v1022 = vpop.f32.mrf.mxu0
    %v1023 = vadd.f32 0.0, %v1022
    %v1024 = vpop.f32.mrf.mxu0
    %1025 = vmatprep.mubr.bf16.mxu0 0
    %1026 = vmatmul.mubr.bf16.gmra.mxu0 %v893
    %v1027 = vpop.f32.mrf.mxu0
    %v1028 = vadd.f32 0.0, %v1027
    %v1029 = vpop.f32.mrf.mxu0
    %v1030 = vpop.f32.mrf.mxu0
    %v1031 = vadd.f32 0.0, %v1030
    %v1032 = vpop.f32.mrf.mxu0
    %1033 = vmatprep.mubr.bf16.mxu0 0
    %1034 = vmatmul.mubr.bf16.gmra.mxu0 %v894
    %v1035 = vpop.f32.mrf.mxu0
    %v1036 = vadd.f32 0.0, %v1035
    %v1037 = vpop.f32.mrf.mxu0
    %v1038 = vpop.f32.mrf.mxu0
    %v1039 = vadd.f32 0.0, %v1038
    %v1040 = vpop.f32.mrf.mxu0
    %1041 = vmatprep.mubr.bf16.mxu0 0
    %1042 = vmatmul.mubr.bf16.gmra.mxu0 %v895
    %v1043 = vpop.f32.mrf.mxu0
    %v1044 = vadd.f32 0.0, %v1043
    %v1045 = vpop.f32.mrf.mxu0
    %v1046 = vpop.f32.mrf.mxu0
    %v1047 = vadd.f32 0.0, %v1046
    %v1048 = vpop.f32.mrf.mxu0
    %1049 = vmatprep.mubr.bf16.mxu0 0
    %1050 = vmatmul.mubr.bf16.gmra.mxu0 %v896
    %v1051 = vpop.f32.mrf.mxu0
    %v1052 = vadd.f32 0.0, %v1051
    %v1053 = vpop.f32.mrf.mxu0
    %v1054 = vpop.f32.mrf.mxu0
    %v1055 = vadd.f32 0.0, %v1054
    %v1056 = vpop.f32.mrf.mxu0
    %1057 = vdwg.mxu0
    %v1058 = vpack.c.bf16 %v999, %v996
    %v1059 = vpack.c.bf16 %v1007, %v1004
    %v1060 = vpack.c.bf16 %v1015, %v1012
    %v1061 = vpack.c.bf16 %v1023, %v1020
    %v1062 = vpack.c.bf16 %v1031, %v1028
    %v1063 = vpack.c.bf16 %v1039, %v1036
    %v1064 = vpack.c.bf16 %v1047, %v1044
    %v1065 = vpack.c.bf16 %v1055, %v1052
    %v1066 = vld [vmem:[%s9] sm:$0x1]
    %v1068 = vlaneseq
    %v1069 = vshrl.u32 %v1068, 7
    %v1070 = vsub.s32 0, %v1069
    %v1071 = vrot.slane %v1066, %v1070
    %v1089 = vunpack.c.l.b16 %v177
    %v1090 = vunpack.c.l.b16 %v178
    %v1091 = vunpack.c.l.b16 %v179
    %v1092 = vunpack.c.l.b16 %v180
    %v1093 = vunpack.c.l.b16 %v181
    %v1094 = vunpack.c.l.b16 %v182
    %v1095 = vunpack.c.l.b16 %v183
    %v1096 = vunpack.c.l.b16 %v184
    %v1097 = vunpack.c.l.b16 %v185
    %v1098 = vunpack.c.l.b16 %v186
    %v1099 = vunpack.c.l.b16 %v187
    %v1100 = vunpack.c.l.b16 %v188
    %v1101 = vunpack.c.l.b16 %v189
    %v1102 = vunpack.c.l.b16 %v190
    %v1103 = vunpack.c.l.b16 %v191
    %v1104 = vunpack.c.l.b16 %v192
    %v1105 = vpack.c.b16 %v1090, %v1089
    %v1106 = vpack.c.b16 %v1092, %v1091
    %v1107 = vpack.c.b16 %v1094, %v1093
    %v1108 = vpack.c.b16 %v1096, %v1095
    %v1109 = vpack.c.b16 %v1098, %v1097
    %v1110 = vpack.c.b16 %v1100, %v1099
    %v1111 = vpack.c.b16 %v1102, %v1101
    %v1112 = vpack.c.b16 %v1104, %v1103
    %1121 = vmatprep.subr.bf16.mxu0 0
    %1122 = vmatpush1.bf16.msra.mxu0 %v1065
    %1123 = vmatprep.subr.bf16.mxu0 0
    %1124 = vmatpush1.bf16.msra.mxu0 %v1064
    %1125 = vmatprep.subr.bf16.mxu0 0
    %1126 = vmatpush1.bf16.msra.mxu0 %v1063
    %1127 = vmatprep.subr.bf16.mxu0 0
    %1128 = vmatpush1.bf16.msra.mxu0 %v1062
    %1129 = vmatprep.subr.bf16.mxu0 0
    %1130 = vmatpush1.bf16.msra.mxu0 %v1061
    %1131 = vmatprep.subr.bf16.mxu0 0
    %1132 = vmatpush1.bf16.msra.mxu0 %v1060
    %1133 = vmatprep.subr.bf16.mxu0 0
    %1134 = vmatpush1.bf16.msra.mxu0 %v1059
    %1135 = vmatprep.subr.bf16.mxu0 0
    %1136 = vmatpush1.bf16.msra.mxu0 %v1058
    %1137 = vmatprep.subr.bf16.mxu0 0
    %1138 = vmatpush2.bf16.msra.mxu0 0
    %1139 = vmatprep.subr.bf16.mxu0 0
    %1140 = vmatpush2.bf16.msra.mxu0 0
    %1141 = vmatprep.subr.bf16.mxu0 0
    %1142 = vmatpush2.bf16.msra.mxu0 0
    %1143 = vmatprep.subr.bf16.mxu0 0
    %1144 = vmatpush2.bf16.msra.mxu0 0
    %1145 = vmatprep.subr.bf16.mxu0 0
    %1146 = vmatpush2.bf16.msra.mxu0 0
    %1147 = vmatprep.subr.bf16.mxu0 0
    %1148 = vmatpush2.bf16.msra.mxu0 0
    %1149 = vmatprep.subr.bf16.mxu0 0
    %1150 = vmatpush2.bf16.msra.mxu0 0
    %1151 = vmatprep.subr.bf16.mxu0 0
    %1152 = vmatpush2.bf16.msra.mxu0 0
    %1153 = vmatprep.mubr.bf16.mxu0 0
    %1154 = vmatmul.mubr.bf16.gmra.mxu0 %v1105
    %v1155 = vpop.f32.mrf.mxu0
    %v1156 = vadd.f32 %v1071, %v1155
    %v1157 = vpop.f32.mrf.mxu0
    %v1158 = vpop.f32.mrf.mxu0
    %v1159 = vadd.f32 %v1071, %v1158
    %v1160 = vpop.f32.mrf.mxu0
    %1161 = vmatprep.mubr.bf16.mxu0 0
    %1162 = vmatmul.mubr.bf16.gmra.mxu0 %v1106
    %v1163 = vpop.f32.mrf.mxu0
    %v1164 = vadd.f32 %v1071, %v1163
    %v1165 = vpop.f32.mrf.mxu0
    %v1166 = vpop.f32.mrf.mxu0
    %v1167 = vadd.f32 %v1071, %v1166
    %v1168 = vpop.f32.mrf.mxu0
    %1169 = vmatprep.mubr.bf16.mxu0 0
    %1170 = vmatmul.mubr.bf16.gmra.mxu0 %v1107
    %v1171 = vpop.f32.mrf.mxu0
    %v1172 = vadd.f32 %v1071, %v1171
    %v1173 = vpop.f32.mrf.mxu0
    %v1174 = vpop.f32.mrf.mxu0
    %v1175 = vadd.f32 %v1071, %v1174
    %v1176 = vpop.f32.mrf.mxu0
    %1177 = vmatprep.mubr.bf16.mxu0 0
    %1178 = vmatmul.mubr.bf16.gmra.mxu0 %v1108
    %v1179 = vpop.f32.mrf.mxu0
    %v1180 = vadd.f32 %v1071, %v1179
    %v1181 = vpop.f32.mrf.mxu0
    %v1182 = vpop.f32.mrf.mxu0
    %v1183 = vadd.f32 %v1071, %v1182
    %v1184 = vpop.f32.mrf.mxu0
    %1185 = vmatprep.mubr.bf16.mxu0 0
    %1186 = vmatmul.mubr.bf16.gmra.mxu0 %v1109
    %v1187 = vpop.f32.mrf.mxu0
    %v1188 = vadd.f32 %v1071, %v1187
    %v1189 = vpop.f32.mrf.mxu0
    %v1190 = vpop.f32.mrf.mxu0
    %v1191 = vadd.f32 %v1071, %v1190
    %v1192 = vpop.f32.mrf.mxu0
    %1193 = vmatprep.mubr.bf16.mxu0 0
    %1194 = vmatmul.mubr.bf16.gmra.mxu0 %v1110
    %v1195 = vpop.f32.mrf.mxu0
    %v1196 = vadd.f32 %v1071, %v1195
    %v1197 = vpop.f32.mrf.mxu0
    %v1198 = vpop.f32.mrf.mxu0
    %v1199 = vadd.f32 %v1071, %v1198
    %v1200 = vpop.f32.mrf.mxu0
    %1201 = vmatprep.mubr.bf16.mxu0 0
    %1202 = vmatmul.mubr.bf16.gmra.mxu0 %v1111
    %v1203 = vpop.f32.mrf.mxu0
    %v1204 = vadd.f32 %v1071, %v1203
    %v1205 = vpop.f32.mrf.mxu0
    %v1206 = vpop.f32.mrf.mxu0
    %v1207 = vadd.f32 %v1071, %v1206
    %v1208 = vpop.f32.mrf.mxu0
    %1209 = vmatprep.mubr.bf16.mxu0 0
    %1210 = vmatmul.mubr.bf16.gmra.mxu0 %v1112
    %v1211 = vpop.f32.mrf.mxu0
    %v1212 = vadd.f32 %v1071, %v1211
    %v1213 = vpop.f32.mrf.mxu0
    %v1214 = vpop.f32.mrf.mxu0
    %v1215 = vadd.f32 %v1071, %v1214
    %v1216 = vpop.f32.mrf.mxu0
    %1217 = vdwg.mxu0
    %v1218 = vmax.f32 %v1156, 0.0
    %v1219 = vmax.f32 %v1159, 0.0
    %v1220 = vmax.f32 %v1164, 0.0
    %v1221 = vmax.f32 %v1167, 0.0
    %v1222 = vmax.f32 %v1172, 0.0
    %v1223 = vmax.f32 %v1175, 0.0
    %v1224 = vmax.f32 %v1180, 0.0
    %v1225 = vmax.f32 %v1183, 0.0
    %v1226 = vmax.f32 %v1188, 0.0
    %v1227 = vmax.f32 %v1191, 0.0
    %v1228 = vmax.f32 %v1196, 0.0
    %v1229 = vmax.f32 %v1199, 0.0
    %v1230 = vmax.f32 %v1204, 0.0
    %v1231 = vmax.f32 %v1207, 0.0
    %v1232 = vmax.f32 %v1212, 0.0
    %v1233 = vmax.f32 %v1215, 0.0
    %v1234 = vpack.c.bf16 %v1219, %v1218
    %v1235 = vpack.c.bf16 %v1221, %v1220
    %v1236 = vpack.c.bf16 %v1223, %v1222
    %v1237 = vpack.c.bf16 %v1225, %v1224
    %v1238 = vpack.c.bf16 %v1227, %v1226
    %v1239 = vpack.c.bf16 %v1229, %v1228
    %v1240 = vpack.c.bf16 %v1231, %v1230
    %v1241 = vpack.c.bf16 %v1233, %v1232
    %v1242 = vld [vmem:[#allocation13] sm:$0xf]
    %v1243 = vld [vmem:[#allocation13 + $0x4] sm:$0xf]
    %v1244 = vld [vmem:[#allocation13 + $0x8] sm:$0xf]
    %v1245 = vld [vmem:[#allocation13 + $0xc] sm:$0xf]
    %v1246 = vld [vmem:[#allocation13 + $0x10] sm:$0xf]
    %v1247 = vld [vmem:[#allocation13 + $0x14] sm:$0xf]
    %v1248 = vld [vmem:[#allocation13 + $0x18] sm:$0xf]
    %v1249 = vld [vmem:[#allocation13 + $0x1c] sm:$0xf]
    %v1250 = vld [vmem:[#allocation13 + $0x20] sm:$0xf]
    %v1251 = vld [vmem:[#allocation13 + $0x24] sm:$0xf]
    %v1252 = vld [vmem:[#allocation13 + $0x28] sm:$0xf]
    %v1253 = vld [vmem:[#allocation13 + $0x2c] sm:$0xf]
    %v1254 = vld [vmem:[#allocation13 + $0x30] sm:$0xf]
    %v1255 = vld [vmem:[#allocation13 + $0x34] sm:$0xf]
    %v1256 = vld [vmem:[#allocation13 + $0x38] sm:$0xf]
    %v1257 = vld [vmem:[#allocation13 + $0x3c] sm:$0xf]
    %v1274 = vunpack.c.l.b16 %v1242
    %v1275 = vunpack.c.l.b16 %v1243
    %v1276 = vunpack.c.l.b16 %v1244
    %v1277 = vunpack.c.l.b16 %v1245
    %v1278 = vunpack.c.l.b16 %v1246
    %v1279 = vunpack.c.l.b16 %v1247
    %v1280 = vunpack.c.l.b16 %v1248
    %v1281 = vunpack.c.l.b16 %v1249
    %v1282 = vunpack.c.l.b16 %v1250
    %v1283 = vunpack.c.l.b16 %v1251
    %v1284 = vunpack.c.l.b16 %v1252
    %v1285 = vunpack.c.l.b16 %v1253
    %v1286 = vunpack.c.l.b16 %v1254
    %v1287 = vunpack.c.l.b16 %v1255
    %v1288 = vunpack.c.l.b16 %v1256
    %v1289 = vunpack.c.l.b16 %v1257
    %v1290 = vpack.c.b16 %v1275, %v1274
    %v1291 = vpack.c.b16 %v1277, %v1276
    %v1292 = vpack.c.b16 %v1279, %v1278
    %v1293 = vpack.c.b16 %v1281, %v1280
    %v1294 = vpack.c.b16 %v1283, %v1282
    %v1295 = vpack.c.b16 %v1285, %v1284
    %v1296 = vpack.c.b16 %v1287, %v1286
    %v1297 = vpack.c.b16 %v1289, %v1288
    %1306 = vmatprep.subr.bf16.mxu0 0
    %1307 = vmatpush1.bf16.msra.mxu0 %v1297
    %1308 = vmatprep.subr.bf16.mxu0 0
    %1309 = vmatpush1.bf16.msra.mxu0 %v1296
    %1310 = vmatprep.subr.bf16.mxu0 0
    %1311 = vmatpush1.bf16.msra.mxu0 %v1295
    %1312 = vmatprep.subr.bf16.mxu0 0
    %1313 = vmatpush1.bf16.msra.mxu0 %v1294
    %1314 = vmatprep.subr.bf16.mxu0 0
    %1315 = vmatpush1.bf16.msra.mxu0 %v1293
    %1316 = vmatprep.subr.bf16.mxu0 0
    %1317 = vmatpush1.bf16.msra.mxu0 %v1292
    %1318 = vmatprep.subr.bf16.mxu0 0
    %1319 = vmatpush1.bf16.msra.mxu0 %v1291
    %1320 = vmatprep.subr.bf16.mxu0 0
    %1321 = vmatpush1.bf16.msra.mxu0 %v1290
    %1322 = vmatprep.subr.bf16.mxu0 0
    %1323 = vmatpush2.bf16.msra.mxu0 0
    %1324 = vmatprep.subr.bf16.mxu0 0
    %1325 = vmatpush2.bf16.msra.mxu0 0
    %1326 = vmatprep.subr.bf16.mxu0 0
    %1327 = vmatpush2.bf16.msra.mxu0 0
    %1328 = vmatprep.subr.bf16.mxu0 0
    %1329 = vmatpush2.bf16.msra.mxu0 0
    %1330 = vmatprep.subr.bf16.mxu0 0
    %1331 = vmatpush2.bf16.msra.mxu0 0
    %1332 = vmatprep.subr.bf16.mxu0 0
    %1333 = vmatpush2.bf16.msra.mxu0 0
    %1334 = vmatprep.subr.bf16.mxu0 0
    %1335 = vmatpush2.bf16.msra.mxu0 0
    %1336 = vmatprep.subr.bf16.mxu0 0
    %1337 = vmatpush2.bf16.msra.mxu0 0
    %1338 = vmatprep.mubr.bf16.mxu0 0
    %1339 = vmatmul.mubr.bf16.gmra.mxu0 %v1234
    %v1340 = vpop.f32.mrf.mxu0
    %v1341 = vadd.f32 0.0, %v1340
    %v1342 = vpop.f32.mrf.mxu0
    %v1343 = vpop.f32.mrf.mxu0
    %v1344 = vadd.f32 0.0, %v1343
    %v1345 = vpop.f32.mrf.mxu0
    %1346 = vmatprep.mubr.bf16.mxu0 0
    %1347 = vmatmul.mubr.bf16.gmra.mxu0 %v1235
    %v1348 = vpop.f32.mrf.mxu0
    %v1349 = vadd.f32 0.0, %v1348
    %v1350 = vpop.f32.mrf.mxu0
    %v1351 = vpop.f32.mrf.mxu0
    %v1352 = vadd.f32 0.0, %v1351
    %v1353 = vpop.f32.mrf.mxu0
    %1354 = vmatprep.mubr.bf16.mxu0 0
    %1355 = vmatmul.mubr.bf16.gmra.mxu0 %v1236
    %v1356 = vpop.f32.mrf.mxu0
    %v1357 = vadd.f32 0.0, %v1356
    %v1358 = vpop.f32.mrf.mxu0
    %v1359 = vpop.f32.mrf.mxu0
    %v1360 = vadd.f32 0.0, %v1359
    %v1361 = vpop.f32.mrf.mxu0
    %1362 = vmatprep.mubr.bf16.mxu0 0
    %1363 = vmatmul.mubr.bf16.gmra.mxu0 %v1237
    %v1364 = vpop.f32.mrf.mxu0
    %v1365 = vadd.f32 0.0, %v1364
    %v1366 = vpop.f32.mrf.mxu0
    %v1367 = vpop.f32.mrf.mxu0
    %v1368 = vadd.f32 0.0, %v1367
    %v1369 = vpop.f32.mrf.mxu0
    %1370 = vmatprep.mubr.bf16.mxu0 0
    %1371 = vmatmul.mubr.bf16.gmra.mxu0 %v1238
    %v1372 = vpop.f32.mrf.mxu0
    %v1373 = vadd.f32 0.0, %v1372
    %v1374 = vpop.f32.mrf.mxu0
    %v1375 = vpop.f32.mrf.mxu0
    %v1376 = vadd.f32 0.0, %v1375
    %v1377 = vpop.f32.mrf.mxu0
    %1378 = vmatprep.mubr.bf16.mxu0 0
    %1379 = vmatmul.mubr.bf16.gmra.mxu0 %v1239
    %v1380 = vpop.f32.mrf.mxu0
    %v1381 = vadd.f32 0.0, %v1380
    %v1382 = vpop.f32.mrf.mxu0
    %v1383 = vpop.f32.mrf.mxu0
    %v1384 = vadd.f32 0.0, %v1383
    %v1385 = vpop.f32.mrf.mxu0
    %1386 = vmatprep.mubr.bf16.mxu0 0
    %1387 = vmatmul.mubr.bf16.gmra.mxu0 %v1240
    %v1388 = vpop.f32.mrf.mxu0
    %v1389 = vadd.f32 0.0, %v1388
    %v1390 = vpop.f32.mrf.mxu0
    %v1391 = vpop.f32.mrf.mxu0
    %v1392 = vadd.f32 0.0, %v1391
    %v1393 = vpop.f32.mrf.mxu0
    %1394 = vmatprep.mubr.bf16.mxu0 0
    %1395 = vmatmul.mubr.bf16.gmra.mxu0 %v1241
    %v1396 = vpop.f32.mrf.mxu0
    %v1397 = vadd.f32 0.0, %v1396
    %v1398 = vpop.f32.mrf.mxu0
    %v1399 = vpop.f32.mrf.mxu0
    %v1400 = vadd.f32 0.0, %v1399
    %v1401 = vpop.f32.mrf.mxu0
    %1402 = vdwg.mxu0
    %v1403 = vpack.c.bf16 %v1344, %v1341
    %v1404 = vpack.c.bf16 %v1352, %v1349
    %v1405 = vpack.c.bf16 %v1360, %v1357
    %v1406 = vpack.c.bf16 %v1368, %v1365
    %v1407 = vpack.c.bf16 %v1376, %v1373
    %v1408 = vpack.c.bf16 %v1384, %v1381
    %v1409 = vpack.c.bf16 %v1392, %v1389
    %v1410 = vpack.c.bf16 %v1400, %v1397
    %v1411 = vld [vmem:[%s11] sm:$0x1]
    %v1413 = vlaneseq
    %v1414 = vshrl.u32 %v1413, 7
    %v1415 = vsub.s32 0, %v1414
    %v1416 = vrot.slane %v1411, %v1415
    %1418 = vmatprep.subr.bf16.mxu0 0
    %1419 = vmatpush1.bf16.msra.mxu0 %v1410
    %1420 = vmatprep.subr.bf16.mxu0 0
    %1421 = vmatpush1.bf16.msra.mxu0 %v1409
    %1422 = vmatprep.subr.bf16.mxu0 0
    %1423 = vmatpush1.bf16.msra.mxu0 %v1408
    %1424 = vmatprep.subr.bf16.mxu0 0
    %1425 = vmatpush1.bf16.msra.mxu0 %v1407
    %1426 = vmatprep.subr.bf16.mxu0 0
    %1427 = vmatpush1.bf16.msra.mxu0 %v1406
    %1428 = vmatprep.subr.bf16.mxu0 0
    %1429 = vmatpush1.bf16.msra.mxu0 %v1405
    %1430 = vmatprep.subr.bf16.mxu0 0
    %1431 = vmatpush1.bf16.msra.mxu0 %v1404
    %1432 = vmatprep.subr.bf16.mxu0 0
    %1433 = vmatpush1.bf16.msra.mxu0 %v1403
    %1434 = vmatprep.subr.bf16.mxu0 0
    %1435 = vmatpush2.bf16.msra.mxu0 0
    %1436 = vmatprep.subr.bf16.mxu0 0
    %1437 = vmatpush2.bf16.msra.mxu0 0
    %1438 = vmatprep.subr.bf16.mxu0 0
    %1439 = vmatpush2.bf16.msra.mxu0 0
    %1440 = vmatprep.subr.bf16.mxu0 0
    %1441 = vmatpush2.bf16.msra.mxu0 0
    %1442 = vmatprep.subr.bf16.mxu0 0
    %1443 = vmatpush2.bf16.msra.mxu0 0
    %1444 = vmatprep.subr.bf16.mxu0 0
    %1445 = vmatpush2.bf16.msra.mxu0 0
    %1446 = vmatprep.subr.bf16.mxu0 0
    %1447 = vmatpush2.bf16.msra.mxu0 0
    %1448 = vmatprep.subr.bf16.mxu0 0
    %1449 = vmatpush2.bf16.msra.mxu0 0
    %1450 = vmatprep.mubr.bf16.mxu0 0
    %1451 = vmatmul.mubr.bf16.gmra.mxu0 %v1105
    %v1452 = vpop.f32.mrf.mxu0
    %v1453 = vadd.f32 %v1416, %v1452
    %v1454 = vpop.f32.mrf.mxu0
    %v1455 = vpop.f32.mrf.mxu0
    %v1456 = vadd.f32 %v1416, %v1455
    %v1457 = vpop.f32.mrf.mxu0
    %1458 = vmatprep.mubr.bf16.mxu0 0
    %1459 = vmatmul.mubr.bf16.gmra.mxu0 %v1106
    %v1460 = vpop.f32.mrf.mxu0
    %v1461 = vadd.f32 %v1416, %v1460
    %v1462 = vpop.f32.mrf.mxu0
    %v1463 = vpop.f32.mrf.mxu0
    %v1464 = vadd.f32 %v1416, %v1463
    %v1465 = vpop.f32.mrf.mxu0
    %1466 = vmatprep.mubr.bf16.mxu0 0
    %1467 = vmatmul.mubr.bf16.gmra.mxu0 %v1107
    %v1468 = vpop.f32.mrf.mxu0
    %v1469 = vadd.f32 %v1416, %v1468
    %v1470 = vpop.f32.mrf.mxu0
    %v1471 = vpop.f32.mrf.mxu0
    %v1472 = vadd.f32 %v1416, %v1471
    %v1473 = vpop.f32.mrf.mxu0
    %1474 = vmatprep.mubr.bf16.mxu0 0
    %1475 = vmatmul.mubr.bf16.gmra.mxu0 %v1108
    %v1476 = vpop.f32.mrf.mxu0
    %v1477 = vadd.f32 %v1416, %v1476
    %v1478 = vpop.f32.mrf.mxu0
    %v1479 = vpop.f32.mrf.mxu0
    %v1480 = vadd.f32 %v1416, %v1479
    %v1481 = vpop.f32.mrf.mxu0
    %1482 = vmatprep.mubr.bf16.mxu0 0
    %1483 = vmatmul.mubr.bf16.gmra.mxu0 %v1109
    %v1484 = vpop.f32.mrf.mxu0
    %v1485 = vadd.f32 %v1416, %v1484
    %v1486 = vpop.f32.mrf.mxu0
    %v1487 = vpop.f32.mrf.mxu0
    %v1488 = vadd.f32 %v1416, %v1487
    %v1489 = vpop.f32.mrf.mxu0
    %1490 = vmatprep.mubr.bf16.mxu0 0
    %1491 = vmatmul.mubr.bf16.gmra.mxu0 %v1110
    %v1492 = vpop.f32.mrf.mxu0
    %v1493 = vadd.f32 %v1416, %v1492
    %v1494 = vpop.f32.mrf.mxu0
    %v1495 = vpop.f32.mrf.mxu0
    %v1496 = vadd.f32 %v1416, %v1495
    %v1497 = vpop.f32.mrf.mxu0
    %1498 = vmatprep.mubr.bf16.mxu0 0
    %1499 = vmatmul.mubr.bf16.gmra.mxu0 %v1111
    %v1500 = vpop.f32.mrf.mxu0
    %v1501 = vadd.f32 %v1416, %v1500
    %v1502 = vpop.f32.mrf.mxu0
    %v1503 = vpop.f32.mrf.mxu0
    %v1504 = vadd.f32 %v1416, %v1503
    %v1505 = vpop.f32.mrf.mxu0
    %1506 = vmatprep.mubr.bf16.mxu0 0
    %1507 = vmatmul.mubr.bf16.gmra.mxu0 %v1112
    %v1508 = vpop.f32.mrf.mxu0
    %v1509 = vadd.f32 %v1416, %v1508
    %v1510 = vpop.f32.mrf.mxu0
    %v1511 = vpop.f32.mrf.mxu0
    %v1512 = vadd.f32 %v1416, %v1511
    %v1513 = vpop.f32.mrf.mxu0
    %1514 = vdwg.mxu0
    %v1515 = vmax.f32 %v1453, 0.0
    %v1516 = vmax.f32 %v1456, 0.0
    %v1517 = vmax.f32 %v1461, 0.0
    %v1518 = vmax.f32 %v1464, 0.0
    %v1519 = vmax.f32 %v1469, 0.0
    %v1520 = vmax.f32 %v1472, 0.0
    %v1521 = vmax.f32 %v1477, 0.0
    %v1522 = vmax.f32 %v1480, 0.0
    %v1523 = vmax.f32 %v1485, 0.0
    %v1524 = vmax.f32 %v1488, 0.0
    %v1525 = vmax.f32 %v1493, 0.0
    %v1526 = vmax.f32 %v1496, 0.0
    %v1527 = vmax.f32 %v1501, 0.0
    %v1528 = vmax.f32 %v1504, 0.0
    %v1529 = vmax.f32 %v1509, 0.0
    %v1530 = vmax.f32 %v1512, 0.0
    %v1531 = vpack.c.bf16 %v1516, %v1515
    %v1532 = vpack.c.bf16 %v1518, %v1517
    %v1533 = vpack.c.bf16 %v1520, %v1519
    %v1534 = vpack.c.bf16 %v1522, %v1521
    %v1535 = vpack.c.bf16 %v1524, %v1523
    %v1536 = vpack.c.bf16 %v1526, %v1525
    %v1537 = vpack.c.bf16 %v1528, %v1527
    %v1538 = vpack.c.bf16 %v1530, %v1529
    %v1539 = vld [vmem:[#allocation14] sm:$0xf]
    %v1540 = vld [vmem:[#allocation14 + $0x4] sm:$0xf]
    %v1541 = vld [vmem:[#allocation14 + $0x8] sm:$0xf]
    %v1542 = vld [vmem:[#allocation14 + $0xc] sm:$0xf]
    %v1543 = vld [vmem:[#allocation14 + $0x10] sm:$0xf]
    %v1544 = vld [vmem:[#allocation14 + $0x14] sm:$0xf]
    %v1545 = vld [vmem:[#allocation14 + $0x18] sm:$0xf]
    %v1546 = vld [vmem:[#allocation14 + $0x1c] sm:$0xf]
    %v1547 = vld [vmem:[#allocation14 + $0x20] sm:$0xf]
    %v1548 = vld [vmem:[#allocation14 + $0x24] sm:$0xf]
    %v1549 = vld [vmem:[#allocation14 + $0x28] sm:$0xf]
    %v1550 = vld [vmem:[#allocation14 + $0x2c] sm:$0xf]
    %v1551 = vld [vmem:[#allocation14 + $0x30] sm:$0xf]
    %v1552 = vld [vmem:[#allocation14 + $0x34] sm:$0xf]
    %v1553 = vld [vmem:[#allocation14 + $0x38] sm:$0xf]
    %v1554 = vld [vmem:[#allocation14 + $0x3c] sm:$0xf]
    %v1555 = vld [vmem:[%s13] sm:$0x1]
    %v1557 = vlaneseq
    %v1558 = vshrl.u32 %v1557, 7
    %v1559 = vsub.s32 0, %v1558
    %v1560 = vrot.slane %v1555, %v1559
    %v1578 = vunpack.c.l.b16 %v1539
    %v1579 = vunpack.c.l.b16 %v1540
    %v1580 = vunpack.c.l.b16 %v1541
    %v1581 = vunpack.c.l.b16 %v1542
    %v1582 = vunpack.c.l.b16 %v1543
    %v1583 = vunpack.c.l.b16 %v1544
    %v1584 = vunpack.c.l.b16 %v1545
    %v1585 = vunpack.c.l.b16 %v1546
    %v1586 = vunpack.c.l.b16 %v1547
    %v1587 = vunpack.c.l.b16 %v1548
    %v1588 = vunpack.c.l.b16 %v1549
    %v1589 = vunpack.c.l.b16 %v1550
    %v1590 = vunpack.c.l.b16 %v1551
    %v1591 = vunpack.c.l.b16 %v1552
    %v1592 = vunpack.c.l.b16 %v1553
    %v1593 = vunpack.c.l.b16 %v1554
    %v1594 = vpack.c.b16 %v1579, %v1578
    %v1595 = vpack.c.b16 %v1581, %v1580
    %v1596 = vpack.c.b16 %v1583, %v1582
    %v1597 = vpack.c.b16 %v1585, %v1584
    %v1598 = vpack.c.b16 %v1587, %v1586
    %v1599 = vpack.c.b16 %v1589, %v1588
    %v1600 = vpack.c.b16 %v1591, %v1590
    %v1601 = vpack.c.b16 %v1593, %v1592
    %1610 = vmatprep.subr.bf16.mxu0 0
    %1611 = vmatpush1.bf16.msra.mxu0 %v1601
    %1612 = vmatprep.subr.bf16.mxu0 0
    %1613 = vmatpush1.bf16.msra.mxu0 %v1600
    %1614 = vmatprep.subr.bf16.mxu0 0
    %1615 = vmatpush1.bf16.msra.mxu0 %v1599
    %1616 = vmatprep.subr.bf16.mxu0 0
    %1617 = vmatpush1.bf16.msra.mxu0 %v1598
    %1618 = vmatprep.subr.bf16.mxu0 0
    %1619 = vmatpush1.bf16.msra.mxu0 %v1597
    %1620 = vmatprep.subr.bf16.mxu0 0
    %1621 = vmatpush1.bf16.msra.mxu0 %v1596
    %1622 = vmatprep.subr.bf16.mxu0 0
    %1623 = vmatpush1.bf16.msra.mxu0 %v1595
    %1624 = vmatprep.subr.bf16.mxu0 0
    %1625 = vmatpush1.bf16.msra.mxu0 %v1594
    %1626 = vmatprep.subr.bf16.mxu0 0
    %1627 = vmatpush2.bf16.msra.mxu0 0
    %1628 = vmatprep.subr.bf16.mxu0 0
    %1629 = vmatpush2.bf16.msra.mxu0 0
    %1630 = vmatprep.subr.bf16.mxu0 0
    %1631 = vmatpush2.bf16.msra.mxu0 0
    %1632 = vmatprep.subr.bf16.mxu0 0
    %1633 = vmatpush2.bf16.msra.mxu0 0
    %1634 = vmatprep.subr.bf16.mxu0 0
    %1635 = vmatpush2.bf16.msra.mxu0 0
    %1636 = vmatprep.subr.bf16.mxu0 0
    %1637 = vmatpush2.bf16.msra.mxu0 0
    %1638 = vmatprep.subr.bf16.mxu0 0
    %1639 = vmatpush2.bf16.msra.mxu0 0
    %1640 = vmatprep.subr.bf16.mxu0 0
    %1641 = vmatpush2.bf16.msra.mxu0 0
    %1642 = vmatprep.mubr.bf16.mxu0 0
    %1643 = vmatmul.mubr.bf16.gmra.mxu0 %v1531
    %v1644 = vpop.f32.mrf.mxu0
    %v1645 = vadd.f32 %v1560, %v1644
    %v1646 = vpop.f32.mrf.mxu0
    %v1647 = vpop.f32.mrf.mxu0
    %v1648 = vadd.f32 %v1560, %v1647
    %v1649 = vpop.f32.mrf.mxu0
    %1650 = vmatprep.mubr.bf16.mxu0 0
    %1651 = vmatmul.mubr.bf16.gmra.mxu0 %v1532
    %v1652 = vpop.f32.mrf.mxu0
    %v1653 = vadd.f32 %v1560, %v1652
    %v1654 = vpop.f32.mrf.mxu0
    %v1655 = vpop.f32.mrf.mxu0
    %v1656 = vadd.f32 %v1560, %v1655
    %v1657 = vpop.f32.mrf.mxu0
    %1658 = vmatprep.mubr.bf16.mxu0 0
    %1659 = vmatmul.mubr.bf16.gmra.mxu0 %v1533
    %v1660 = vpop.f32.mrf.mxu0
    %v1661 = vadd.f32 %v1560, %v1660
    %v1662 = vpop.f32.mrf.mxu0
    %v1663 = vpop.f32.mrf.mxu0
    %v1664 = vadd.f32 %v1560, %v1663
    %v1665 = vpop.f32.mrf.mxu0
    %1666 = vmatprep.mubr.bf16.mxu0 0
    %1667 = vmatmul.mubr.bf16.gmra.mxu0 %v1534
    %v1668 = vpop.f32.mrf.mxu0
    %v1669 = vadd.f32 %v1560, %v1668
    %v1670 = vpop.f32.mrf.mxu0
    %v1671 = vpop.f32.mrf.mxu0
    %v1672 = vadd.f32 %v1560, %v1671
    %v1673 = vpop.f32.mrf.mxu0
    %1674 = vmatprep.mubr.bf16.mxu0 0
    %1675 = vmatmul.mubr.bf16.gmra.mxu0 %v1535
    %v1676 = vpop.f32.mrf.mxu0
    %v1677 = vadd.f32 %v1560, %v1676
    %v1678 = vpop.f32.mrf.mxu0
    %v1679 = vpop.f32.mrf.mxu0
    %v1680 = vadd.f32 %v1560, %v1679
    %v1681 = vpop.f32.mrf.mxu0
    %1682 = vmatprep.mubr.bf16.mxu0 0
    %1683 = vmatmul.mubr.bf16.gmra.mxu0 %v1536
    %v1684 = vpop.f32.mrf.mxu0
    %v1685 = vadd.f32 %v1560, %v1684
    %v1686 = vpop.f32.mrf.mxu0
    %v1687 = vpop.f32.mrf.mxu0
    %v1688 = vadd.f32 %v1560, %v1687
    %v1689 = vpop.f32.mrf.mxu0
    %1690 = vmatprep.mubr.bf16.mxu0 0
    %1691 = vmatmul.mubr.bf16.gmra.mxu0 %v1537
    %v1692 = vpop.f32.mrf.mxu0
    %v1693 = vadd.f32 %v1560, %v1692
    %v1694 = vpop.f32.mrf.mxu0
    %v1695 = vpop.f32.mrf.mxu0
    %v1696 = vadd.f32 %v1560, %v1695
    %v1697 = vpop.f32.mrf.mxu0
    %1698 = vmatprep.mubr.bf16.mxu0 0
    %1699 = vmatmul.mubr.bf16.gmra.mxu0 %v1538
    %v1700 = vpop.f32.mrf.mxu0
    %v1701 = vadd.f32 %v1560, %v1700
    %v1702 = vpop.f32.mrf.mxu0
    %v1703 = vpop.f32.mrf.mxu0
    %v1704 = vadd.f32 %v1560, %v1703
    %v1705 = vpop.f32.mrf.mxu0
    %1706 = vdwg.mxu0
    %v1707 = vlaneseq
    %v1708 = vand.u32 %v1707, 127
    %vm1709 = vcmp.lt.s32.totalorder %v1708, 8
    %v1710 = vsel %vm1709, %v1645, -1e+30
    %v1711 = vsel %vm1709, %v1648, -1e+30
    %v1712 = vsel %vm1709, %v1653, -1e+30
    %v1713 = vsel %vm1709, %v1656, -1e+30
    %v1714 = vsel %vm1709, %v1661, -1e+30
    %v1715 = vsel %vm1709, %v1664, -1e+30
    %v1716 = vsel %vm1709, %v1669, -1e+30
    %v1717 = vsel %vm1709, %v1672, -1e+30
    %v1718 = vsel %vm1709, %v1677, -1e+30
    %v1719 = vsel %vm1709, %v1680, -1e+30
    %v1720 = vsel %vm1709, %v1685, -1e+30
    %v1721 = vsel %vm1709, %v1688, -1e+30
    %v1722 = vsel %vm1709, %v1693, -1e+30
    %v1723 = vsel %vm1709, %v1696, -1e+30
    %v1724 = vsel %vm1709, %v1701, -1e+30
    %v1725 = vsel %vm1709, %v1704, -1e+30
    %1726 = vmax.xlane.f32.xlu0 %v1710
    %v1727 = vpop.xlane.xlu0 %1726
    %1728 = vmax.xlane.f32.xlu0 %v1711
    %v1729 = vpop.xlane.xlu0 %1728
    %1730 = vmax.xlane.f32.xlu0 %v1712
    %v1731 = vpop.xlane.xlu0 %1730
    %1732 = vmax.xlane.f32.xlu0 %v1713
    %v1733 = vpop.xlane.xlu0 %1732
    %1734 = vmax.xlane.f32.xlu0 %v1714
    %v1735 = vpop.xlane.xlu0 %1734
    %1736 = vmax.xlane.f32.xlu0 %v1715
    %v1737 = vpop.xlane.xlu0 %1736
    %1738 = vmax.xlane.f32.xlu0 %v1716
    %v1739 = vpop.xlane.xlu0 %1738
    %1740 = vmax.xlane.f32.xlu0 %v1717
    %v1741 = vpop.xlane.xlu0 %1740
    %1742 = vmax.xlane.f32.xlu0 %v1718
    %v1743 = vpop.xlane.xlu0 %1742
    %1744 = vmax.xlane.f32.xlu0 %v1719
    %v1745 = vpop.xlane.xlu0 %1744
    %1746 = vmax.xlane.f32.xlu0 %v1720
    %v1747 = vpop.xlane.xlu0 %1746
    %1748 = vmax.xlane.f32.xlu0 %v1721
    %v1749 = vpop.xlane.xlu0 %1748
    %1750 = vmax.xlane.f32.xlu0 %v1722
    %v1751 = vpop.xlane.xlu0 %1750
    %1752 = vmax.xlane.f32.xlu0 %v1723
    %v1753 = vpop.xlane.xlu0 %1752
    %1754 = vmax.xlane.f32.xlu0 %v1724
    %v1755 = vpop.xlane.xlu0 %1754
    %1756 = vmax.xlane.f32.xlu0 %v1725
    %v1757 = vpop.xlane.xlu0 %1756
    %v1758 = vsub.f32 %v1710, %v1727
    %v1759 = vsub.f32 %v1711, %v1729
    %v1760 = vsub.f32 %v1712, %v1731
    %v1761 = vsub.f32 %v1713, %v1733
    %v1762 = vsub.f32 %v1714, %v1735
    %v1763 = vsub.f32 %v1715, %v1737
    %v1764 = vsub.f32 %v1716, %v1739
    %v1765 = vsub.f32 %v1717, %v1741
    %v1766 = vsub.f32 %v1718, %v1743
    %v1767 = vsub.f32 %v1719, %v1745
    %v1768 = vsub.f32 %v1720, %v1747
    %v1769 = vsub.f32 %v1721, %v1749
    %v1770 = vsub.f32 %v1722, %v1751
    %v1771 = vsub.f32 %v1723, %v1753
    %v1772 = vsub.f32 %v1724, %v1755
    %v1773 = vsub.f32 %v1725, %v1757
    %v1774 = vmul.f32 %v1758, 1.442695
    %v1775 = vpow.pop %v1774
    %v1776 = vmul.f32 %v1759, 1.442695
    %v1777 = vpow.pop %v1776
    %v1778 = vmul.f32 %v1760, 1.442695
    %v1779 = vpow.pop %v1778
    %v1780 = vmul.f32 %v1761, 1.442695
    %v1781 = vpow.pop %v1780
    %v1782 = vmul.f32 %v1762, 1.442695
    %v1783 = vpow.pop %v1782
    %v1784 = vmul.f32 %v1763, 1.442695
    %v1785 = vpow.pop %v1784
    %v1786 = vmul.f32 %v1764, 1.442695
    %v1787 = vpow.pop %v1786
    %v1788 = vmul.f32 %v1765, 1.442695
    %v1789 = vpow.pop %v1788
    %v1790 = vmul.f32 %v1766, 1.442695
    %v1791 = vpow.pop %v1790
    %v1792 = vmul.f32 %v1767, 1.442695
    %v1793 = vpow.pop %v1792
    %v1794 = vmul.f32 %v1768, 1.442695
    %v1795 = vpow.pop %v1794
    %v1796 = vmul.f32 %v1769, 1.442695
    %v1797 = vpow.pop %v1796
    %v1798 = vmul.f32 %v1770, 1.442695
    %v1799 = vpow.pop %v1798
    %v1800 = vmul.f32 %v1771, 1.442695
    %v1801 = vpow.pop %v1800
    %v1802 = vmul.f32 %v1772, 1.442695
    %v1803 = vpow.pop %v1802
    %v1804 = vmul.f32 %v1773, 1.442695
    %v1805 = vpow.pop %v1804
    %1806 = vadd.xlane.f32.xlu0 %v1775
    %v1807 = vpop.xlane.xlu0 %1806
    %1808 = vadd.xlane.f32.xlu0 %v1777
    %v1809 = vpop.xlane.xlu0 %1808
    %1810 = vadd.xlane.f32.xlu0 %v1779
    %v1811 = vpop.xlane.xlu0 %1810
    %1812 = vadd.xlane.f32.xlu0 %v1781
    %v1813 = vpop.xlane.xlu0 %1812
    %1814 = vadd.xlane.f32.xlu0 %v1783
    %v1815 = vpop.xlane.xlu0 %1814
    %1816 = vadd.xlane.f32.xlu0 %v1785
    %v1817 = vpop.xlane.xlu0 %1816
    %1818 = vadd.xlane.f32.xlu0 %v1787
    %v1819 = vpop.xlane.xlu0 %1818
    %1820 = vadd.xlane.f32.xlu0 %v1789
    %v1821 = vpop.xlane.xlu0 %1820
    %1822 = vadd.xlane.f32.xlu0 %v1791
    %v1823 = vpop.xlane.xlu0 %1822
    %1824 = vadd.xlane.f32.xlu0 %v1793
    %v1825 = vpop.xlane.xlu0 %1824
    %1826 = vadd.xlane.f32.xlu0 %v1795
    %v1827 = vpop.xlane.xlu0 %1826
    %1828 = vadd.xlane.f32.xlu0 %v1797
    %v1829 = vpop.xlane.xlu0 %1828
    %1830 = vadd.xlane.f32.xlu0 %v1799
    %v1831 = vpop.xlane.xlu0 %1830
    %1832 = vadd.xlane.f32.xlu0 %v1801
    %v1833 = vpop.xlane.xlu0 %1832
    %1834 = vadd.xlane.f32.xlu0 %v1803
    %v1835 = vpop.xlane.xlu0 %1834
    %1836 = vadd.xlane.f32.xlu0 %v1805
    %v1837 = vpop.xlane.xlu0 %1836
    %v1838 = vlog2.pop %v1807
    %v1839 = vmul.f32 %v1838, 0.6931472
    %v1840 = vlog2.pop %v1809
    %v1841 = vmul.f32 %v1840, 0.6931472
    %v1842 = vlog2.pop %v1811
    %v1843 = vmul.f32 %v1842, 0.6931472
    %v1844 = vlog2.pop %v1813
    %v1845 = vmul.f32 %v1844, 0.6931472
    %v1846 = vlog2.pop %v1815
    %v1847 = vmul.f32 %v1846, 0.6931472
    %v1848 = vlog2.pop %v1817
    %v1849 = vmul.f32 %v1848, 0.6931472
    %v1850 = vlog2.pop %v1819
    %v1851 = vmul.f32 %v1850, 0.6931472
    %v1852 = vlog2.pop %v1821
    %v1853 = vmul.f32 %v1852, 0.6931472
    %v1854 = vlog2.pop %v1823
    %v1855 = vmul.f32 %v1854, 0.6931472
    %v1856 = vlog2.pop %v1825
    %v1857 = vmul.f32 %v1856, 0.6931472
    %v1858 = vlog2.pop %v1827
    %v1859 = vmul.f32 %v1858, 0.6931472
    %v1860 = vlog2.pop %v1829
    %v1861 = vmul.f32 %v1860, 0.6931472
    %v1862 = vlog2.pop %v1831
    %v1863 = vmul.f32 %v1862, 0.6931472
    %v1864 = vlog2.pop %v1833
    %v1865 = vmul.f32 %v1864, 0.6931472
    %v1866 = vlog2.pop %v1835
    %v1867 = vmul.f32 %v1866, 0.6931472
    %v1868 = vlog2.pop %v1837
    %v1869 = vmul.f32 %v1868, 0.6931472
    %v1870 = vsub.f32 %v1758, %v1839
    %v1871 = vsub.f32 %v1759, %v1841
    %v1872 = vsub.f32 %v1760, %v1843
    %v1873 = vsub.f32 %v1761, %v1845
    %v1874 = vsub.f32 %v1762, %v1847
    %v1875 = vsub.f32 %v1763, %v1849
    %v1876 = vsub.f32 %v1764, %v1851
    %v1877 = vsub.f32 %v1765, %v1853
    %v1878 = vsub.f32 %v1766, %v1855
    %v1879 = vsub.f32 %v1767, %v1857
    %v1880 = vsub.f32 %v1768, %v1859
    %v1881 = vsub.f32 %v1769, %v1861
    %v1882 = vsub.f32 %v1770, %v1863
    %v1883 = vsub.f32 %v1771, %v1865
    %v1884 = vsub.f32 %v1772, %v1867
    %v1885 = vsub.f32 %v1773, %v1869
    %1886 = vst [vmem:[#allocation16] sm:$0xff] %v1870
    %1887 = vst [vmem:[#allocation16 + $0x8] sm:$0xff] %v1871
    %1888 = vst [vmem:[#allocation16 + $0x10] sm:$0xff] %v1872
    %1889 = vst [vmem:[#allocation16 + $0x18] sm:$0xff] %v1873
    %1890 = vst [vmem:[#allocation16 + $0x20] sm:$0xff] %v1874
    %1891 = vst [vmem:[#allocation16 + $0x28] sm:$0xff] %v1875
    %1892 = vst [vmem:[#allocation16 + $0x30] sm:$0xff] %v1876
    %1893 = vst [vmem:[#allocation16 + $0x38] sm:$0xff] %v1877
    %1894 = vst [vmem:[#allocation16 + $0x40] sm:$0xff] %v1878
    %1895 = vst [vmem:[#allocation16 + $0x48] sm:$0xff] %v1879
    %1896 = vst [vmem:[#allocation16 + $0x50] sm:$0xff] %v1880
    %1897 = vst [vmem:[#allocation16 + $0x58] sm:$0xff] %v1881
    %1898 = vst [vmem:[#allocation16 + $0x60] sm:$0xff] %v1882
    %1899 = vst [vmem:[#allocation16 + $0x68] sm:$0xff] %v1883
    %1900 = vst [vmem:[#allocation16 + $0x70] sm:$0xff] %v1884
    %1901 = vst [vmem:[#allocation16 + $0x78] sm:$0xff] %v1885
    %v1902 = vpack.c.bf16 %v844, %v842
    %v1903 = vpack.c.bf16 %v848, %v846
    %v1904 = vpack.c.bf16 %v852, %v850
    %v1905 = vpack.c.bf16 %v856, %v854
    %v1906 = vpack.c.bf16 %v860, %v858
    %v1907 = vpack.c.bf16 %v864, %v862
    %v1908 = vpack.c.bf16 %v868, %v866
    %v1909 = vpack.c.bf16 %v872, %v870
    %v1918 = vunpack.c.l.b16 %v1902
    %v1919 = vunpack.c.h.b16 %v1902
    %v1920 = vunpack.c.l.b16 %v1903
    %v1921 = vunpack.c.h.b16 %v1903
    %v1922 = vunpack.c.l.b16 %v1904
    %v1923 = vunpack.c.h.b16 %v1904
    %v1924 = vunpack.c.l.b16 %v1905
    %v1925 = vunpack.c.h.b16 %v1905
    %v1926 = vunpack.c.l.b16 %v1906
    %v1927 = vunpack.c.h.b16 %v1906
    %v1928 = vunpack.c.l.b16 %v1907
    %v1929 = vunpack.c.h.b16 %v1907
    %v1930 = vunpack.c.l.b16 %v1908
    %v1931 = vunpack.c.h.b16 %v1908
    %v1932 = vunpack.c.l.b16 %v1909
    %v1933 = vunpack.c.h.b16 %v1909
    %v1934 = vpack.c.b16 %v1918, %v1918
    %v1935 = vpack.c.b16 %v1919, %v1919
    %v1936 = vpack.c.b16 %v1920, %v1920
    %v1937 = vpack.c.b16 %v1921, %v1921
    %v1938 = vpack.c.b16 %v1922, %v1922
    %v1939 = vpack.c.b16 %v1923, %v1923
    %v1940 = vpack.c.b16 %v1924, %v1924
    %v1941 = vpack.c.b16 %v1925, %v1925
    %v1942 = vpack.c.b16 %v1926, %v1926
    %v1943 = vpack.c.b16 %v1927, %v1927
    %v1944 = vpack.c.b16 %v1928, %v1928
    %v1945 = vpack.c.b16 %v1929, %v1929
    %v1946 = vpack.c.b16 %v1930, %v1930
    %v1947 = vpack.c.b16 %v1931, %v1931
    %v1948 = vpack.c.b16 %v1932, %v1932
    %v1949 = vpack.c.b16 %v1933, %v1933
    %1966 = vst [vmem:[#allocation17] sm:$0xf] %v1934
    %1967 = vst [vmem:[#allocation17 + $0x4] sm:$0xf] %v1935
    %1968 = vst [vmem:[#allocation17 + $0x8] sm:$0xf] %v1936
    %1969 = vst [vmem:[#allocation17 + $0xc] sm:$0xf] %v1937
    %1970 = vst [vmem:[#allocation17 + $0x10] sm:$0xf] %v1938
    %1971 = vst [vmem:[#allocation17 + $0x14] sm:$0xf] %v1939
    %1972 = vst [vmem:[#allocation17 + $0x18] sm:$0xf] %v1940
    %1973 = vst [vmem:[#allocation17 + $0x1c] sm:$0xf] %v1941
    %1974 = vst [vmem:[#allocation17 + $0x20] sm:$0xf] %v1942
    %1975 = vst [vmem:[#allocation17 + $0x24] sm:$0xf] %v1943
    %1976 = vst [vmem:[#allocation17 + $0x28] sm:$0xf] %v1944
    %1977 = vst [vmem:[#allocation17 + $0x2c] sm:$0xf] %v1945
    %1978 = vst [vmem:[#allocation17 + $0x30] sm:$0xf] %v1946
    %1979 = vst [vmem:[#allocation17 + $0x34] sm:$0xf] %v1947
    %1980 = vst [vmem:[#allocation17 + $0x38] sm:$0xf] %v1948
    %1981 = vst [vmem:[#allocation17 + $0x3c] sm:$0xf] %v1949
    // Predicated region
    $region90: #{tpu_custom_call.1} parent=1 // pred_check
      _
    $region91: #{tpu_custom_call.1} parent=1 // pred_check_branch
      %1983 = sbr.rel (0) target = $region93
    $region92: #{tpu_custom_call.1} parent=1 // pred_region
      %s1985 = ssub.s32 2048, 2048
      %1986 = vsyncadd [#allocation4], %s1985
      %s1987 = sshll.u32 [#allocation16], 4
      %s1988 = int_to_ptr.vmem [resolvable:$true] %s1987
      %1993 = dma.vmem_to_hbm [thread:$0]  %s1988, 2048, %s14, [#allocation4], 128, 128, 8
    $region93: #{tpu_custom_call.1} parent=1 // pred_fallthru
      _
    // Predicated region
    $region94: #{tpu_custom_call.1} parent=1 // pred_check
      _
    $region95: #{tpu_custom_call.1} parent=1 // pred_check_branch
      %1995 = sbr.rel (0) target = $region97
    $region96: #{tpu_custom_call.1} parent=1 // pred_region
      %s1997 = ssub.s32 1024, 1024
      %1998 = vsyncadd [#allocation18], %s1997
      %s1999 = sshll.u32 [#allocation17], 4
      %s2000 = int_to_ptr.vmem [resolvable:$true] %s1999
      %2005 = dma.vmem_to_hbm [thread:$0]  %s2000, 1024, %s15, [#allocation18], 64, 64, 4
    $region97: #{tpu_custom_call.1} parent=1 // pred_fallthru
      _
    // Predicated region
    $region98: #{tpu_custom_call.1} parent=1 // pred_check
      _
    $region99: #{tpu_custom_call.1} parent=1 // pred_check_branch
      %2007 = sbr.rel (0) target = $region101
    $region100: #{tpu_custom_call.1} parent=1 // pred_region
      %2008 = dma.done [#allocation4], 2048
    $region101: #{tpu_custom_call.1} parent=1 // pred_fallthru
      _
    // Predicated region
    $region102: #{tpu_custom_call.1} parent=1 // pred_check
      _
    $region103: #{tpu_custom_call.1} parent=1 // pred_check_branch
      %2010 = sbr.rel (0) target = $region105
    $region104: #{tpu_custom_call.1} parent=1 // pred_region
      %2011 = dma.done [#allocation18], 1024
    $region105: #{tpu_custom_call.1} parent=1 // pred_fallthru
      _
    %2012 = vsyncpa [#allocation3], 1
    %2013 = vsyncpa [#allocation6], 1
    %2014 = vsyncpa [#allocation9], 1
    %2015 = vsyncpa [#allocation12], 1
    %2016 = vsyncpa [#allocation15], 1
    %2017 = vsyncpa [#allocation4], 1
    %2018 = vsyncpa [#allocation18], 1

</llo_original>
